<compile_context>
chip_gen: v6e
topology: v6e:2x2x1
jax: 0.10.0
libtpu: 0.0.40
codegen_flags: <defaults>
</compile_context>

<pallas_src>
import jax
import jax.numpy as jnp
from jax.experimental import pallas as pl
from jax.experimental.pallas import tpu as pltpu  # noqa: F401  (kept for TPU-specific tuning hooks)

# ----------------------------- configuration -------------------------------
DIM = 32          # entity / relation embedding dim
HEADS = 2         # attention heads
POW_ITER = 3      # power-iteration steps
ALPHA = 0.1       # PPR teleport prob
ATT_DROPOUT = 0.1  # TODO(synk): F.dropout is training-mode only; eval = identity here
N_ENT = 16        # number of entities
N_REL = 8         # number of relations
N_EDGE = 64       # number of edges


# --------------------------- fused forward kernel ---------------------------
def _dagn_fused_kernel(m_ref, mt_ref, t_ref, r_ref, ent_ref, rel_ref,
                       wh_ref, wt_ref, wr_ref, ah_ref, at_ref, ar_ref,
                       wo_ref, out_ref):
    """Whole DAGNConv forward, single grid step, all operands VMEM-resident."""
    dot = lambda a, b: jnp.dot(a, b, preferred_element_type=jnp.float32)

    M = m_ref[...]        # [E, N]   one-hot(head_ids)
    MT = mt_ref[...]      # [N, E]
    T = t_ref[...]        # [E, N]   one-hot(tail_ids)
    R = r_ref[...]        # [E, NR]  one-hot(edge_type)
    ent = ent_ref[...]    # [N, DIM]
    rel = rel_ref[...]    # [NR, DIM]

    # Projections at node/relation granularity (linear => commutes with the
    # one-hot gather), then scatter to edges with one-hot matmuls (MXU).
    p_h = dot(M, dot(ent, wh_ref[...]))     # [E, HEADS*DIM]
    p_t = dot(T, dot(ent, wt_ref[...]))     # [E, HEADS*DIM]
    p_r = dot(R, dot(rel, wr_ref[...]))     # [E, HEADS*DIM]

    # Attention scores: block-diagonal stacked att vectors turn the per-head
    # mul + cross-lane reduce + concat into one [E,HD]@[HD,HEADS] dot per term.
    s = (dot(jnp.tanh(p_h), ah_ref[...])
         + dot(jnp.tanh(p_t), at_ref[...])
         + dot(jnp.tanh(p_r), ar_ref[...]))             # [E, HEADS]
    s = jnp.where(s > 0.0, s, 0.01 * s)                 # leaky_relu(0.01)

    z0 = ent
    acc = jnp.zeros((N_ENT, DIM), jnp.float32)
    for h in range(HEADS):                              # HEADS=2, fully unrolled
        sh = s[:, h:h + 1]                              # [E, 1]

        # segment softmax grouped by head node
        masked = jnp.where(M > 0.0, sh, -1e30)          # [E, N]
        gmax = jnp.max(masked, axis=0, keepdims=True)   # [1, N]  per-group max
        emax = jnp.sum(M * gmax, axis=1, keepdims=True)  # [E, 1]  gather back
        ex = jnp.exp(sh - emax)                          # [E, 1]
        gsum = jnp.sum(M * ex, axis=0, keepdims=True)    # [1, N]  per-group sum
        esum = jnp.sum(M * gsum, axis=1, keepdims=True)  # [E, 1]  gather back
        att = ex * pl.reciprocal(esum + 1e-16, approx=True)

        # A_h = M^T @ diag((1-alpha)*att) @ T, diag folded as a row-scale of T.
        A = dot(MT, ((1.0 - ALPHA) * att) * T)           # [N, N]

        # PPR power iteration (unrolled)
        z = z0
        for _ in range(POW_ITER):
            z = dot(A, z) + ALPHA * z0                   # [N, DIM]

        # This head's contribution through W_o (row-block of W_o^T).
        acc = acc + dot(z, wo_ref[h * DIM:(h + 1) * DIM, :])

    out_ref[...] = acc


def _stack_att(att):
    """[HEADS, DIM] -> block-diagonal [HEADS*DIM, HEADS] so that
    (tanh(p) @ stacked)[e, h] == sum_d tanh(p)[e, h*DIM + d] * att[h, d]."""
    eye = jnp.eye(HEADS, dtype=att.dtype)
    return (att[:, :, None] * eye[:, None, :]).reshape(HEADS * DIM, HEADS)


# ------------------------------ forward glue --------------------------------
@jax.jit
def dagn_conv_forward(entity_embed, relation_embed, edge_index, edge_type, params):
    head_ids, tail_ids = edge_index[0], edge_index[1]
    node_ids = jnp.arange(N_ENT)
    rel_ids = jnp.arange(N_REL)

    # one-hot incidence matrices; edge gather/scatter become in-kernel matmuls
    M = (head_ids[:, None] == node_ids[None, :]).astype(jnp.float32)   # [E, N]
    T = (tail_ids[:, None] == node_ids[None, :]).astype(jnp.float32)   # [E, N]
    R = (edge_type[:, None] == rel_ids[None, :]).astype(jnp.float32)   # [E, NR]
    # TODO(synk): the dense one-hot formulation is O(E*N); for production graph
    # sizes switch to scalar-prefetch gathers / manual DMA over edge chunks.

    return pl.pallas_call(
        _dagn_fused_kernel,
        out_shape=jax.ShapeDtypeStruct((N_ENT, DIM), jnp.float32),
    )(M, M.T, T, R, entity_embed, relation_embed,
      params["WhT"], params["WtT"], params["WrT"],
      _stack_att(params["att_h"]), _stack_att(params["att_t"]),
      _stack_att(params["att_r"]), params["WoT"])


# --------------------------- pure-JAX reference ------------------------------
def reference_forward(entity_embed, relation_embed, edge_index, edge_type, params):
    head_ids, tail_ids = edge_index[0], edge_index[1]
    e_h = entity_embed[head_ids]
    e_t = entity_embed[tail_ids]
    e_r = relation_embed[edge_type]

    def sc(e, WT, att):
        W = jnp.dot(e, WT).reshape(-1, HEADS, DIM)
        return jnp.sum(jnp.tanh(W) * att[None], axis=-1)

    s = (sc(e_h, params["WhT"], params["att_h"])
         + sc(e_t, params["WtT"], params["att_t"])
         + sc(e_r, params["WrT"], params["att_r"]))
    s = jnp.where(s > 0.0, s, 0.01 * s)

    gmax = jax.ops.segment_max(s, head_ids, num_segments=N_ENT)
    ex = jnp.exp(s - gmax[head_ids])
    gsum = jax.ops.segment_sum(ex, head_ids, num_segments=N_ENT)
    att = ex / (gsum[head_ids] + 1e-16)

    vals = (1.0 - ALPHA) * att
    outs = []
    for h in range(HEADS):
        A = jnp.zeros((N_ENT, N_ENT)).at[head_ids, tail_ids].add(vals[:, h])
        z0 = entity_embed
        z = z0
        for _ in range(POW_ITER):
            z = A @ z + ALPHA * z0
        outs.append(z)
    Z = jnp.stack(outs, axis=1).reshape(N_ENT, HEADS * DIM)
    return Z @ params["WoT"]


# ----------------------------------- main ------------------------------------
def _glorot(key, shape):
    fan_in, fan_out = shape[-2], shape[-1]
    lim = (6.0 / (fan_in + fan_out)) ** 0.5
    return jax.random.uniform(key, shape, jnp.float32, -lim, lim)


if __name__ == "__main__":
    key = jax.random.PRNGKey(0)
    ks = jax.random.split(key, 12)

    entity_embed = jax.random.normal(ks[0], (N_ENT, DIM), jnp.float32)
    relation_embed = jax.random.normal(ks[1], (N_REL, DIM), jnp.float32)
    head_ids = jax.random.randint(ks[2], (N_EDGE,), 0, N_ENT)
    tail_ids = jax.random.randint(ks[3], (N_EDGE,), 0, N_ENT)
    edge_index = jnp.stack([head_ids, tail_ids], axis=0)          # [2, E]
    edge_type = jax.random.randint(ks[4], (N_EDGE,), 0, N_REL)    # [E]

    params = {
        # stored pre-transposed: Linear(x) == x @ W^T, so we keep W^T directly
        "WhT": _glorot(ks[5], (DIM, HEADS * DIM)),
        "WtT": _glorot(ks[6], (DIM, HEADS * DIM)),
        "WrT": _glorot(ks[7], (DIM, HEADS * DIM)),
        "WoT": _glorot(ks[8], (HEADS * DIM, DIM)),
        "att_h": _glorot(ks[9], (HEADS, DIM)),
        "att_t": _glorot(ks[10], (HEADS, DIM)),
        "att_r": _glorot(ks[11], (HEADS, DIM)),
    }

    out = dagn_conv_forward(entity_embed, relation_embed, edge_index, edge_type, params)
    out = jax.block_until_ready(out)

    ref = reference_forward(entity_embed, relation_embed, edge_index, edge_type, params)
    ref = jax.block_until_ready(ref)

    assert out.shape == (N_ENT, DIM), out.shape
    max_err = float(jnp.max(jnp.abs(out - ref)))
    assert max_err < 5e-3, f"mismatch vs reference: {max_err}"

    print("KERNEL_OK")
</pallas_src>

<mosaic_0001>
module attributes {stable_mosaic.version = 11 : i64} {
  func.func @_dagn_fused_kernel(%arg0: memref<64x16xf32, #tpu.memory_space<vmem>>, %arg1: memref<16x64xf32, #tpu.memory_space<vmem>>, %arg2: memref<64x16xf32, #tpu.memory_space<vmem>>, %arg3: memref<64x8xf32, #tpu.memory_space<vmem>>, %arg4: memref<16x32xf32, #tpu.memory_space<vmem>>, %arg5: memref<8x32xf32, #tpu.memory_space<vmem>>, %arg6: memref<32x64xf32, #tpu.memory_space<vmem>>, %arg7: memref<32x64xf32, #tpu.memory_space<vmem>>, %arg8: memref<32x64xf32, #tpu.memory_space<vmem>>, %arg9: memref<64x2xf32, #tpu.memory_space<vmem>>, %arg10: memref<64x2xf32, #tpu.memory_space<vmem>>, %arg11: memref<64x2xf32, #tpu.memory_space<vmem>>, %arg12: memref<64x32xf32, #tpu.memory_space<vmem>>, %arg13: memref<16x32xf32, #tpu.memory_space<vmem>>) attributes {dimension_semantics = [], scalar_prefetch = 0 : i64, scratch_operands = 0 : i64, tpu.core_type = #tpu.core_type<tc>} {
    %c0 = arith.constant 0 : index
    %c0_0 = arith.constant 0 : index
    %0 = vector.load %arg0[%c0, %c0_0] : memref<64x16xf32, #tpu.memory_space<vmem>>, vector<64x16xf32>
    %c0_1 = arith.constant 0 : index
    %c0_2 = arith.constant 0 : index
    %1 = vector.load %arg1[%c0_1, %c0_2] : memref<16x64xf32, #tpu.memory_space<vmem>>, vector<16x64xf32>
    %c0_3 = arith.constant 0 : index
    %c0_4 = arith.constant 0 : index
    %2 = vector.load %arg2[%c0_3, %c0_4] : memref<64x16xf32, #tpu.memory_space<vmem>>, vector<64x16xf32>
    %c0_5 = arith.constant 0 : index
    %c0_6 = arith.constant 0 : index
    %3 = vector.load %arg3[%c0_5, %c0_6] : memref<64x8xf32, #tpu.memory_space<vmem>>, vector<64x8xf32>
    %c0_7 = arith.constant 0 : index
    %c0_8 = arith.constant 0 : index
    %4 = vector.load %arg4[%c0_7, %c0_8] : memref<16x32xf32, #tpu.memory_space<vmem>>, vector<16x32xf32>
    %c0_9 = arith.constant 0 : index
    %c0_10 = arith.constant 0 : index
    %5 = vector.load %arg5[%c0_9, %c0_10] : memref<8x32xf32, #tpu.memory_space<vmem>>, vector<8x32xf32>
    %c0_11 = arith.constant 0 : index
    %c0_12 = arith.constant 0 : index
    %6 = vector.load %arg6[%c0_11, %c0_12] : memref<32x64xf32, #tpu.memory_space<vmem>>, vector<32x64xf32>
    %cst = arith.constant dense<0.000000e+00> : vector<16x64xf32>
    %7 = tpu.matmul %4, %6, %cst {dimension_numbers = #tpu.dot_dimension_numbers<[1], [0], [0], [1], [0, 0, 1, 1], [], []>} : vector<16x32xf32>, vector<32x64xf32>, vector<16x64xf32> -> vector<16x64xf32>
    %cst_13 = arith.constant dense<0.000000e+00> : vector<64x64xf32>
    %8 = tpu.matmul %0, %7, %cst_13 {dimension_numbers = #tpu.dot_dimension_numbers<[1], [0], [0], [1], [0, 0, 1, 1], [], []>} : vector<64x16xf32>, vector<16x64xf32>, vector<64x64xf32> -> vector<64x64xf32>
    %c0_14 = arith.constant 0 : index
    %c0_15 = arith.constant 0 : index
    %9 = vector.load %arg7[%c0_14, %c0_15] : memref<32x64xf32, #tpu.memory_space<vmem>>, vector<32x64xf32>
    %cst_16 = arith.constant dense<0.000000e+00> : vector<16x64xf32>
    %10 = tpu.matmul %4, %9, %cst_16 {dimension_numbers = #tpu.dot_dimension_numbers<[1], [0], [0], [1], [0, 0, 1, 1], [], []>} : vector<16x32xf32>, vector<32x64xf32>, vector<16x64xf32> -> vector<16x64xf32>
    %cst_17 = arith.constant dense<0.000000e+00> : vector<64x64xf32>
    %11 = tpu.matmul %2, %10, %cst_17 {dimension_numbers = #tpu.dot_dimension_numbers<[1], [0], [0], [1], [0, 0, 1, 1], [], []>} : vector<64x16xf32>, vector<16x64xf32>, vector<64x64xf32> -> vector<64x64xf32>
    %c0_18 = arith.constant 0 : index
    %c0_19 = arith.constant 0 : index
    %12 = vector.load %arg8[%c0_18, %c0_19] : memref<32x64xf32, #tpu.memory_space<vmem>>, vector<32x64xf32>
    %cst_20 = arith.constant dense<0.000000e+00> : vector<8x64xf32>
    %13 = tpu.matmul %5, %12, %cst_20 {dimension_numbers = #tpu.dot_dimension_numbers<[1], [0], [0], [1], [0, 0, 1, 1], [], []>} : vector<8x32xf32>, vector<32x64xf32>, vector<8x64xf32> -> vector<8x64xf32>
    %cst_21 = arith.constant dense<0.000000e+00> : vector<64x64xf32>
    %14 = tpu.matmul %3, %13, %cst_21 {dimension_numbers = #tpu.dot_dimension_numbers<[1], [0], [0], [1], [0, 0, 1, 1], [], []>} : vector<64x8xf32>, vector<8x64xf32>, vector<64x64xf32> -> vector<64x64xf32>
    %15 = math.tanh %8 : vector<64x64xf32>
    %c0_22 = arith.constant 0 : index
    %c0_23 = arith.constant 0 : index
    %16 = vector.load %arg9[%c0_22, %c0_23] : memref<64x2xf32, #tpu.memory_space<vmem>>, vector<64x2xf32>
    %cst_24 = arith.constant dense<0.000000e+00> : vector<64x2xf32>
    %17 = tpu.matmul %15, %16, %cst_24 {dimension_numbers = #tpu.dot_dimension_numbers<[1], [0], [0], [1], [0, 0, 1, 1], [], []>} : vector<64x64xf32>, vector<64x2xf32>, vector<64x2xf32> -> vector<64x2xf32>
    %18 = math.tanh %11 : vector<64x64xf32>
    %c0_25 = arith.constant 0 : index
    %c0_26 = arith.constant 0 : index
    %19 = vector.load %arg10[%c0_25, %c0_26] : memref<64x2xf32, #tpu.memory_space<vmem>>, vector<64x2xf32>
    %cst_27 = arith.constant dense<0.000000e+00> : vector<64x2xf32>
    %20 = tpu.matmul %18, %19, %cst_27 {dimension_numbers = #tpu.dot_dimension_numbers<[1], [0], [0], [1], [0, 0, 1, 1], [], []>} : vector<64x64xf32>, vector<64x2xf32>, vector<64x2xf32> -> vector<64x2xf32>
    %21 = arith.addf %17, %20 : vector<64x2xf32>
    %22 = math.tanh %14 : vector<64x64xf32>
    %c0_28 = arith.constant 0 : index
    %c0_29 = arith.constant 0 : index
    %23 = vector.load %arg11[%c0_28, %c0_29] : memref<64x2xf32, #tpu.memory_space<vmem>>, vector<64x2xf32>
    %cst_30 = arith.constant dense<0.000000e+00> : vector<64x2xf32>
    %24 = tpu.matmul %22, %23, %cst_30 {dimension_numbers = #tpu.dot_dimension_numbers<[1], [0], [0], [1], [0, 0, 1, 1], [], []>} : vector<64x64xf32>, vector<64x2xf32>, vector<64x2xf32> -> vector<64x2xf32>
    %25 = arith.addf %21, %24 : vector<64x2xf32>
    %cst_31 = arith.constant 0.000000e+00 : f32
    %26 = vector.broadcast %cst_31 : f32 to vector<64x2xf32>
    %27 = arith.cmpf ogt, %25, %26 : vector<64x2xf32>
    %cst_32 = arith.constant 0.00999999977 : f32
    %28 = vector.broadcast %cst_32 : f32 to vector<64x2xf32>
    %29 = arith.mulf %28, %25 : vector<64x2xf32>
    %30 = arith.select %27, %25, %29 : vector<64x2xi1>, vector<64x2xf32>
    %cst_33 = arith.constant 0.000000e+00 : f32
    %31 = vector.broadcast %cst_33 : f32 to vector<16x32xf32>
    %32 = vector.extract_strided_slice %30 {offsets = [0, 0], sizes = [64, 1], strides = [1, 1]} : vector<64x2xf32> to vector<64x1xf32>
    %cst_34 = arith.constant 0.000000e+00 : f32
    %33 = vector.broadcast %cst_34 : f32 to vector<64x16xf32>
    %34 = arith.cmpf ogt, %0, %33 : vector<64x16xf32>
    %cst_35 = arith.constant -1.000000e+30 : f32
    %35 = vector.shape_cast %32 : vector<64x1xf32> to vector<64x1xf32>
    %36 = vector.broadcast %35 : vector<64x1xf32> to vector<64x16xf32>
    %37 = vector.broadcast %cst_35 : f32 to vector<64x16xf32>
    %38 = arith.select %34, %36, %37 : vector<64x16xi1>, vector<64x16xf32>
    %cst_36 = arith.constant dense<0xFF800000> : vector<16xf32>
    %39 = vector.multi_reduction <maximumf>, %38, %cst_36 [0] : vector<64x16xf32> to vector<16xf32>
    %40 = vector.shape_cast %39 : vector<16xf32> to vector<1x16xf32>
    %41 = vector.broadcast %40 : vector<1x16xf32> to vector<64x16xf32>
    %42 = arith.mulf %0, %41 : vector<64x16xf32>
    %cst_37 = arith.constant dense<0.000000e+00> : vector<64xf32>
    %43 = vector.multi_reduction <add>, %42, %cst_37 [1] : vector<64x16xf32> to vector<64xf32>
    %44 = vector.shape_cast %43 : vector<64xf32> to vector<64x1xf32>
    %45 = arith.subf %32, %44 : vector<64x1xf32>
    %46 = math.exp %45 : vector<64x1xf32>
    %47 = vector.broadcast %46 : vector<64x1xf32> to vector<64x16xf32>
    %48 = arith.mulf %0, %47 : vector<64x16xf32>
    %cst_38 = arith.constant dense<0.000000e+00> : vector<16xf32>
    %49 = vector.multi_reduction <add>, %48, %cst_38 [0] : vector<64x16xf32> to vector<16xf32>
    %50 = vector.shape_cast %49 : vector<16xf32> to vector<1x16xf32>
    %51 = vector.broadcast %50 : vector<1x16xf32> to vector<64x16xf32>
    %52 = arith.mulf %0, %51 : vector<64x16xf32>
    %cst_39 = arith.constant dense<0.000000e+00> : vector<64xf32>
    %53 = vector.multi_reduction <add>, %52, %cst_39 [1] : vector<64x16xf32> to vector<64xf32>
    %54 = vector.shape_cast %53 : vector<64xf32> to vector<64x1xf32>
    %cst_40 = arith.constant 1.000000e-16 : f32
    %55 = vector.broadcast %cst_40 : f32 to vector<64x1xf32>
    %56 = arith.addf %54, %55 : vector<64x1xf32>
    %57 = tpu.reciprocal %56 {approx = true} : vector<64x1xf32> -> vector<64x1xf32>
    %58 = arith.mulf %46, %57 : vector<64x1xf32>
    %cst_41 = arith.constant 0.899999976 : f32
    %59 = vector.broadcast %cst_41 : f32 to vector<64x1xf32>
    %60 = arith.mulf %59, %58 : vector<64x1xf32>
    %61 = vector.broadcast %60 : vector<64x1xf32> to vector<64x16xf32>
    %62 = arith.mulf %61, %2 : vector<64x16xf32>
    %cst_42 = arith.constant dense<0.000000e+00> : vector<16x16xf32>
    %63 = tpu.matmul %1, %62, %cst_42 {dimension_numbers = #tpu.dot_dimension_numbers<[1], [0], [0], [1], [0, 0, 1, 1], [], []>} : vector<16x64xf32>, vector<64x16xf32>, vector<16x16xf32> -> vector<16x16xf32>
    %cst_43 = arith.constant dense<0.000000e+00> : vector<16x32xf32>
    %64 = tpu.matmul %63, %4, %cst_43 {dimension_numbers = #tpu.dot_dimension_numbers<[1], [0], [0], [1], [0, 0, 1, 1], [], []>} : vector<16x16xf32>, vector<16x32xf32>, vector<16x32xf32> -> vector<16x32xf32>
    %cst_44 = arith.constant 1.000000e-01 : f32
    %65 = vector.broadcast %cst_44 : f32 to vector<16x32xf32>
    %66 = arith.mulf %65, %4 : vector<16x32xf32>
    %67 = arith.addf %64, %66 : vector<16x32xf32>
    %cst_45 = arith.constant dense<0.000000e+00> : vector<16x32xf32>
    %68 = tpu.matmul %63, %67, %cst_45 {dimension_numbers = #tpu.dot_dimension_numbers<[1], [0], [0], [1], [0, 0, 1, 1], [], []>} : vector<16x16xf32>, vector<16x32xf32>, vector<16x32xf32> -> vector<16x32xf32>
    %cst_46 = arith.constant 1.000000e-01 : f32
    %69 = vector.broadcast %cst_46 : f32 to vector<16x32xf32>
    %70 = arith.mulf %69, %4 : vector<16x32xf32>
    %71 = arith.addf %68, %70 : vector<16x32xf32>
    %cst_47 = arith.constant dense<0.000000e+00> : vector<16x32xf32>
    %72 = tpu.matmul %63, %71, %cst_47 {dimension_numbers = #tpu.dot_dimension_numbers<[1], [0], [0], [1], [0, 0, 1, 1], [], []>} : vector<16x16xf32>, vector<16x32xf32>, vector<16x32xf32> -> vector<16x32xf32>
    %cst_48 = arith.constant 1.000000e-01 : f32
    %73 = vector.broadcast %cst_48 : f32 to vector<16x32xf32>
    %74 = arith.mulf %73, %4 : vector<16x32xf32>
    %75 = arith.addf %72, %74 : vector<16x32xf32>
    %c0_49 = arith.constant 0 : index
    %c0_50 = arith.constant 0 : index
    %76 = vector.load %arg12[%c0_49, %c0_50] : memref<64x32xf32, #tpu.memory_space<vmem>>, vector<32x32xf32>
    %cst_51 = arith.constant dense<0.000000e+00> : vector<16x32xf32>
    %77 = tpu.matmul %75, %76, %cst_51 {dimension_numbers = #tpu.dot_dimension_numbers<[1], [0], [0], [1], [0, 0, 1, 1], [], []>} : vector<16x32xf32>, vector<32x32xf32>, vector<16x32xf32> -> vector<16x32xf32>
    %78 = arith.addf %31, %77 : vector<16x32xf32>
    %79 = vector.extract_strided_slice %30 {offsets = [0, 1], sizes = [64, 1], strides = [1, 1]} : vector<64x2xf32> to vector<64x1xf32>
    %cst_52 = arith.constant 0.000000e+00 : f32
    %80 = vector.broadcast %cst_52 : f32 to vector<64x16xf32>
    %81 = arith.cmpf ogt, %0, %80 : vector<64x16xf32>
    %cst_53 = arith.constant -1.000000e+30 : f32
    %82 = vector.shape_cast %79 : vector<64x1xf32> to vector<64x1xf32>
    %83 = vector.broadcast %82 : vector<64x1xf32> to vector<64x16xf32>
    %84 = vector.broadcast %cst_53 : f32 to vector<64x16xf32>
    %85 = arith.select %81, %83, %84 : vector<64x16xi1>, vector<64x16xf32>
    %cst_54 = arith.constant dense<0xFF800000> : vector<16xf32>
    %86 = vector.multi_reduction <maximumf>, %85, %cst_54 [0] : vector<64x16xf32> to vector<16xf32>
    %87 = vector.shape_cast %86 : vector<16xf32> to vector<1x16xf32>
    %88 = vector.broadcast %87 : vector<1x16xf32> to vector<64x16xf32>
    %89 = arith.mulf %0, %88 : vector<64x16xf32>
    %cst_55 = arith.constant dense<0.000000e+00> : vector<64xf32>
    %90 = vector.multi_reduction <add>, %89, %cst_55 [1] : vector<64x16xf32> to vector<64xf32>
    %91 = vector.shape_cast %90 : vector<64xf32> to vector<64x1xf32>
    %92 = arith.subf %79, %91 : vector<64x1xf32>
    %93 = math.exp %92 : vector<64x1xf32>
    %94 = vector.broadcast %93 : vector<64x1xf32> to vector<64x16xf32>
    %95 = arith.mulf %0, %94 : vector<64x16xf32>
    %cst_56 = arith.constant dense<0.000000e+00> : vector<16xf32>
    %96 = vector.multi_reduction <add>, %95, %cst_56 [0] : vector<64x16xf32> to vector<16xf32>
    %97 = vector.shape_cast %96 : vector<16xf32> to vector<1x16xf32>
    %98 = vector.broadcast %97 : vector<1x16xf32> to vector<64x16xf32>
    %99 = arith.mulf %0, %98 : vector<64x16xf32>
    %cst_57 = arith.constant dense<0.000000e+00> : vector<64xf32>
    %100 = vector.multi_reduction <add>, %99, %cst_57 [1] : vector<64x16xf32> to vector<64xf32>
    %101 = vector.shape_cast %100 : vector<64xf32> to vector<64x1xf32>
    %cst_58 = arith.constant 1.000000e-16 : f32
    %102 = vector.broadcast %cst_58 : f32 to vector<64x1xf32>
    %103 = arith.addf %101, %102 : vector<64x1xf32>
    %104 = tpu.reciprocal %103 {approx = true} : vector<64x1xf32> -> vector<64x1xf32>
    %105 = arith.mulf %93, %104 : vector<64x1xf32>
    %cst_59 = arith.constant 0.899999976 : f32
    %106 = vector.broadcast %cst_59 : f32 to vector<64x1xf32>
    %107 = arith.mulf %106, %105 : vector<64x1xf32>
    %108 = vector.broadcast %107 : vector<64x1xf32> to vector<64x16xf32>
    %109 = arith.mulf %108, %2 : vector<64x16xf32>
    %cst_60 = arith.constant dense<0.000000e+00> : vector<16x16xf32>
    %110 = tpu.matmul %1, %109, %cst_60 {dimension_numbers = #tpu.dot_dimension_numbers<[1], [0], [0], [1], [0, 0, 1, 1], [], []>} : vector<16x64xf32>, vector<64x16xf32>, vector<16x16xf32> -> vector<16x16xf32>
    %cst_61 = arith.constant dense<0.000000e+00> : vector<16x32xf32>
    %111 = tpu.matmul %110, %4, %cst_61 {dimension_numbers = #tpu.dot_dimension_numbers<[1], [0], [0], [1], [0, 0, 1, 1], [], []>} : vector<16x16xf32>, vector<16x32xf32>, vector<16x32xf32> -> vector<16x32xf32>
    %cst_62 = arith.constant 1.000000e-01 : f32
    %112 = vector.broadcast %cst_62 : f32 to vector<16x32xf32>
    %113 = arith.mulf %112, %4 : vector<16x32xf32>
    %114 = arith.addf %111, %113 : vector<16x32xf32>
    %cst_63 = arith.constant dense<0.000000e+00> : vector<16x32xf32>
    %115 = tpu.matmul %110, %114, %cst_63 {dimension_numbers = #tpu.dot_dimension_numbers<[1], [0], [0], [1], [0, 0, 1, 1], [], []>} : vector<16x16xf32>, vector<16x32xf32>, vector<16x32xf32> -> vector<16x32xf32>
    %cst_64 = arith.constant 1.000000e-01 : f32
    %116 = vector.broadcast %cst_64 : f32 to vector<16x32xf32>
    %117 = arith.mulf %116, %4 : vector<16x32xf32>
    %118 = arith.addf %115, %117 : vector<16x32xf32>
    %cst_65 = arith.constant dense<0.000000e+00> : vector<16x32xf32>
    %119 = tpu.matmul %110, %118, %cst_65 {dimension_numbers = #tpu.dot_dimension_numbers<[1], [0], [0], [1], [0, 0, 1, 1], [], []>} : vector<16x16xf32>, vector<16x32xf32>, vector<16x32xf32> -> vector<16x32xf32>
    %cst_66 = arith.constant 1.000000e-01 : f32
    %120 = vector.broadcast %cst_66 : f32 to vector<16x32xf32>
    %121 = arith.mulf %120, %4 : vector<16x32xf32>
    %122 = arith.addf %119, %121 : vector<16x32xf32>
    %c32 = arith.constant 32 : index
    %c0_67 = arith.constant 0 : index
    %123 = vector.load %arg12[%c32, %c0_67] : memref<64x32xf32, #tpu.memory_space<vmem>>, vector<32x32xf32>
    %cst_68 = arith.constant dense<0.000000e+00> : vector<16x32xf32>
    %124 = tpu.matmul %122, %123, %cst_68 {dimension_numbers = #tpu.dot_dimension_numbers<[1], [0], [0], [1], [0, 0, 1, 1], [], []>} : vector<16x32xf32>, vector<32x32xf32>, vector<16x32xf32> -> vector<16x32xf32>
    %125 = arith.addf %78, %124 : vector<16x32xf32>
    %c0_69 = arith.constant 0 : index
    %c0_70 = arith.constant 0 : index
    %126 = vector.load %arg13[%c0_69, %c0_70] : memref<16x32xf32, #tpu.memory_space<vmem>>, vector<16x32xf32>
    tpu.vector_store %arg13[%c0_69, %c0_70], %125 {strides = array<i32>} : memref<16x32xf32, #tpu.memory_space<vmem>>, vector<16x32xf32>,
    return
  }
}

</mosaic_0001>

<llo_original>
// kernel: dagn_conv_forward.1
$region0: #{dagn_conv_forward.1}
  #allocation0 [shape = 'u32[]', space=smem, size = 0x4, offset = 0x4, fixed_abs, tag = 'smem constant byte address 0x4 - core index']
  #allocation1 [shape = 'u32[144,128]{1,0:T(1,128)}', space=vmem, size = 0x12000, scoped, tag = 'internal scratch']
  %s0 = inlined_call_operand.vmem [shape: f32[64,16], index: 0, kind: input, shape index: {}]
  %s1 = inlined_call_operand.vmem [shape: f32[16,64], index: 1, kind: input, shape index: {}]
  %s2 = inlined_call_operand.vmem [shape: f32[64,16], index: 2, kind: input, shape index: {}]
  %s3 = inlined_call_operand.vmem [shape: f32[64,8], index: 3, kind: input, shape index: {}]
  %s4 = inlined_call_operand.vmem [shape: f32[16,32], index: 4, kind: input, shape index: {}]
  %s5 = inlined_call_operand.vmem [shape: f32[8,32], index: 5, kind: input, shape index: {}]
  %s6 = inlined_call_operand.vmem [shape: f32[32,64], index: 6, kind: input, shape index: {}]
  %s7 = inlined_call_operand.vmem [shape: f32[32,64], index: 7, kind: input, shape index: {}]
  %s8 = inlined_call_operand.vmem [shape: f32[32,64], index: 8, kind: input, shape index: {}]
  %s9 = inlined_call_operand.vmem [shape: f32[64,2], index: 9, kind: input, shape index: {}]
  %s10 = inlined_call_operand.vmem [shape: f32[64,2], index: 10, kind: input, shape index: {}]
  %s11 = inlined_call_operand.vmem [shape: f32[64,2], index: 11, kind: input, shape index: {}]
  %s12 = inlined_call_operand.vmem [shape: f32[64,32], index: 12, kind: input, shape index: {}]
  %s13 = inlined_call_operand.hbm [shape: f32[16,32], index: 13, kind: output, shape index: {}]
  %s14 = sld [smem:[#allocation0]]
  $region62: #{dagn_conv_forward.1} parent=0
    _
  %s16 = ssub.s32 1, %s14
  %s17 = scalar_select 0, %s16, %s14
  $region1: #{dagn_conv_forward.1} parent=0
    #allocation2 [shape = 'u8[8192]{0}', space=vmem, size = 0x2000, scoped, tag = 'output window, operand 0, single buffered']
    #allocation3 [shape = 's32[1]{0}', space=sflag, size = 0x4, scoped, tag = 'scoped memory for dagn_conv_forward.1']
    %18 = vsyncpa [#allocation3], 0
    // Predicated region
    $region2: #{dagn_conv_forward.1} parent=1 // pred_check
      _
    $region3: #{dagn_conv_forward.1} parent=1 // pred_check_branch
      %20 = sbr.rel (0) target = $region5
    $region4: #{dagn_conv_forward.1} parent=1 // pred_region
      _
    $region5: #{dagn_conv_forward.1} parent=1 // pred_fallthru
      _
    // Predicated region
    $region6: #{dagn_conv_forward.1} parent=1 // pred_check
      _
    $region7: #{dagn_conv_forward.1} parent=1 // pred_check_branch
      %22 = sbr.rel (0) target = $region9
    $region8: #{dagn_conv_forward.1} parent=1 // pred_region
      _
    $region9: #{dagn_conv_forward.1} parent=1 // pred_fallthru
      _
    // Predicated region
    $region10: #{dagn_conv_forward.1} parent=1 // pred_check
      _
    $region11: #{dagn_conv_forward.1} parent=1 // pred_check_branch
      %24 = sbr.rel (0) target = $region13
    $region12: #{dagn_conv_forward.1} parent=1 // pred_region
      _
    $region13: #{dagn_conv_forward.1} parent=1 // pred_fallthru
      _
    // Predicated region
    $region14: #{dagn_conv_forward.1} parent=1 // pred_check
      _
    $region15: #{dagn_conv_forward.1} parent=1 // pred_check_branch
      %26 = sbr.rel (0) target = $region17
    $region16: #{dagn_conv_forward.1} parent=1 // pred_region
      _
    $region17: #{dagn_conv_forward.1} parent=1 // pred_fallthru
      _
    // Predicated region
    $region18: #{dagn_conv_forward.1} parent=1 // pred_check
      _
    $region19: #{dagn_conv_forward.1} parent=1 // pred_check_branch
      %28 = sbr.rel (0) target = $region21
    $region20: #{dagn_conv_forward.1} parent=1 // pred_region
      _
    $region21: #{dagn_conv_forward.1} parent=1 // pred_fallthru
      _
    // Predicated region
    $region22: #{dagn_conv_forward.1} parent=1 // pred_check
      _
    $region23: #{dagn_conv_forward.1} parent=1 // pred_check_branch
      %30 = sbr.rel (0) target = $region25
    $region24: #{dagn_conv_forward.1} parent=1 // pred_region
      _
    $region25: #{dagn_conv_forward.1} parent=1 // pred_fallthru
      _
    // Predicated region
    $region26: #{dagn_conv_forward.1} parent=1 // pred_check
      _
    $region27: #{dagn_conv_forward.1} parent=1 // pred_check_branch
      %32 = sbr.rel (0) target = $region29
    $region28: #{dagn_conv_forward.1} parent=1 // pred_region
      _
    $region29: #{dagn_conv_forward.1} parent=1 // pred_fallthru
      _
    // Predicated region
    $region30: #{dagn_conv_forward.1} parent=1 // pred_check
      _
    $region31: #{dagn_conv_forward.1} parent=1 // pred_check_branch
      %34 = sbr.rel (0) target = $region33
    $region32: #{dagn_conv_forward.1} parent=1 // pred_region
      _
    $region33: #{dagn_conv_forward.1} parent=1 // pred_fallthru
      _
    // Predicated region
    $region34: #{dagn_conv_forward.1} parent=1 // pred_check
      _
    $region35: #{dagn_conv_forward.1} parent=1 // pred_check_branch
      %36 = sbr.rel (0) target = $region37
    $region36: #{dagn_conv_forward.1} parent=1 // pred_region
      _
    $region37: #{dagn_conv_forward.1} parent=1 // pred_fallthru
      _
    // Predicated region
    $region38: #{dagn_conv_forward.1} parent=1 // pred_check
      _
    $region39: #{dagn_conv_forward.1} parent=1 // pred_check_branch
      %38 = sbr.rel (0) target = $region41
    $region40: #{dagn_conv_forward.1} parent=1 // pred_region
      _
    $region41: #{dagn_conv_forward.1} parent=1 // pred_fallthru
      _
    // Predicated region
    $region42: #{dagn_conv_forward.1} parent=1 // pred_check
      _
    $region43: #{dagn_conv_forward.1} parent=1 // pred_check_branch
      %40 = sbr.rel (0) target = $region45
    $region44: #{dagn_conv_forward.1} parent=1 // pred_region
      _
    $region45: #{dagn_conv_forward.1} parent=1 // pred_fallthru
      _
    // Predicated region
    $region46: #{dagn_conv_forward.1} parent=1 // pred_check
      _
    $region47: #{dagn_conv_forward.1} parent=1 // pred_check_branch
      %42 = sbr.rel (0) target = $region49
    $region48: #{dagn_conv_forward.1} parent=1 // pred_region
      _
    $region49: #{dagn_conv_forward.1} parent=1 // pred_fallthru
      _
    // Predicated region
    $region50: #{dagn_conv_forward.1} parent=1 // pred_check
      _
    $region51: #{dagn_conv_forward.1} parent=1 // pred_check_branch
      %44 = sbr.rel (0) target = $region53
    $region52: #{dagn_conv_forward.1} parent=1 // pred_region
      _
    $region53: #{dagn_conv_forward.1} parent=1 // pred_fallthru
      _
    %v45 = vld [vmem:[%s0] sm:$0xff]
    %v46 = vld [vmem:[%s0 + $0x8] sm:$0xff]
    %v47 = vld [vmem:[%s0 + $0x10] sm:$0xff]
    %v48 = vld [vmem:[%s0 + $0x18] sm:$0xff]
    %v49 = vld [vmem:[%s0 + $0x20] sm:$0xff]
    %v50 = vld [vmem:[%s0 + $0x28] sm:$0xff]
    %v51 = vld [vmem:[%s0 + $0x30] sm:$0xff]
    %v52 = vld [vmem:[%s0 + $0x38] sm:$0xff]
    %v53 = vld [vmem:[%s1] sm:$0xff]
    %v54 = vld [vmem:[%s1 + $0x8] sm:$0xff]
    %v55 = vld [vmem:[%s2] sm:$0xff]
    %v56 = vld [vmem:[%s2 + $0x8] sm:$0xff]
    %v57 = vld [vmem:[%s2 + $0x10] sm:$0xff]
    %v58 = vld [vmem:[%s2 + $0x18] sm:$0xff]
    %v59 = vld [vmem:[%s2 + $0x20] sm:$0xff]
    %v60 = vld [vmem:[%s2 + $0x28] sm:$0xff]
    %v61 = vld [vmem:[%s2 + $0x30] sm:$0xff]
    %v62 = vld [vmem:[%s2 + $0x38] sm:$0xff]
    %v63 = vld [vmem:[%s3] sm:$0xff]
    %v64 = vld [vmem:[%s3 + $0x8] sm:$0xff]
    %v65 = vld [vmem:[%s3 + $0x10] sm:$0xff]
    %v66 = vld [vmem:[%s3 + $0x18] sm:$0xff]
    %v67 = vld [vmem:[%s3 + $0x20] sm:$0xff]
    %v68 = vld [vmem:[%s3 + $0x28] sm:$0xff]
    %v69 = vld [vmem:[%s3 + $0x30] sm:$0xff]
    %v70 = vld [vmem:[%s3 + $0x38] sm:$0xff]
    %v71 = vld [vmem:[%s4] sm:$0xff]
    %v72 = vld [vmem:[%s4 + $0x8] sm:$0xff]
    %v73 = vld [vmem:[%s5] sm:$0xff]
    %v74 = vld [vmem:[%s6] sm:$0xff]
    %v75 = vld [vmem:[%s6 + $0x8] sm:$0xff]
    %v76 = vld [vmem:[%s6 + $0x10] sm:$0xff]
    %v77 = vld [vmem:[%s6 + $0x18] sm:$0xff]
    %vm78 = vcmask 261120
    %v80 = vsel %vm78, %v71, 0
    %v83 = vsel %vm78, %v72, 0
    %85 = vmatprep.subr.mxu0 0.0
    %86 = vmatpush1.msra.mxu0 0.0
    %87 = vmatprep.subr.mxu0 0.0
    %88 = vmatpush1.msra.mxu0 0.0
    %89 = vmatprep.subr.mxu0 0.0
    %90 = vmatpush1.msra.mxu0 0.0
    %91 = vmatprep.subr.mxu0 0.0
    %92 = vmatpush1.msra.mxu0 0.0
    %93 = vmatprep.subr.mxu0 0.0
    %94 = vmatpush1.msra.mxu0 0.0
    %95 = vmatprep.subr.mxu0 0.0
    %96 = vmatpush1.msra.mxu0 0.0
    %97 = vmatprep.subr.mxu0 0.0
    %98 = vmatpush1.msra.mxu0 0.0
    %99 = vmatprep.subr.mxu0 0.0
    %100 = vmatpush1.msra.mxu0 0.0
    %101 = vmatprep.subr.mxu0 0.0
    %102 = vmatpush1.msra.mxu0 0.0
    %103 = vmatprep.subr.mxu0 0.0
    %104 = vmatpush1.msra.mxu0 0.0
    %105 = vmatprep.subr.mxu0 0.0
    %106 = vmatpush1.msra.mxu0 0.0
    %107 = vmatprep.subr.mxu0 0.0
    %108 = vmatpush1.msra.mxu0 0.0
    %109 = vmatprep.subr.mxu0 0.0
    %110 = vmatpush1.msra.mxu0 %v77
    %111 = vmatprep.subr.mxu0 0.0
    %112 = vmatpush1.msra.mxu0 %v76
    %113 = vmatprep.subr.mxu0 0.0
    %114 = vmatpush1.msra.mxu0 %v75
    %115 = vmatprep.subr.mxu0 0.0
    %116 = vmatpush1.msra.mxu0 %v74
    %117 = vmatprep.subr.mxu0 0.0
    %118 = vmatpush2.msra.mxu0 0.0
    %119 = vmatprep.subr.mxu0 0.0
    %120 = vmatpush2.msra.mxu0 0.0
    %121 = vmatprep.subr.mxu0 0.0
    %122 = vmatpush2.msra.mxu0 0.0
    %123 = vmatprep.subr.mxu0 0.0
    %124 = vmatpush2.msra.mxu0 0.0
    %125 = vmatprep.subr.mxu0 0.0
    %126 = vmatpush2.msra.mxu0 0.0
    %127 = vmatprep.subr.mxu0 0.0
    %128 = vmatpush2.msra.mxu0 0.0
    %129 = vmatprep.subr.mxu0 0.0
    %130 = vmatpush2.msra.mxu0 0.0
    %131 = vmatprep.subr.mxu0 0.0
    %132 = vmatpush2.msra.mxu0 0.0
    %133 = vmatprep.subr.mxu0 0.0
    %134 = vmatpush2.msra.mxu0 0.0
    %135 = vmatprep.subr.mxu0 0.0
    %136 = vmatpush2.msra.mxu0 0.0
    %137 = vmatprep.subr.mxu0 0.0
    %138 = vmatpush2.msra.mxu0 0.0
    %139 = vmatprep.subr.mxu0 0.0
    %140 = vmatpush2.msra.mxu0 0.0
    %141 = vmatprep.subr.mxu0 0.0
    %142 = vmatpush2.msra.mxu0 0.0
    %143 = vmatprep.subr.mxu0 0.0
    %144 = vmatpush2.msra.mxu0 0.0
    %145 = vmatprep.subr.mxu0 0.0
    %146 = vmatpush2.msra.mxu0 0.0
    %147 = vmatprep.subr.mxu0 0.0
    %148 = vmatpush2.msra.mxu0 0.0
    %149 = vmatprep.mubr.f32.mxu0 0.0
    %150 = vmatmul.mubr.f32.gmra.mxu0 %v80
    %v151 = vpop.f32.mrf.mxu0
    %v152 = vadd.f32 0.0, %v151
    %v153 = vpop.f32.mrf.mxu0
    %154 = vmatprep.mubr.f32.mxu0 0.0
    %155 = vmatmul.mubr.f32.gmra.mxu0 %v83
    %v156 = vpop.f32.mrf.mxu0
    %v157 = vadd.f32 0.0, %v156
    %v158 = vpop.f32.mrf.mxu0
    %159 = vdwg.mxu0
    %vm160 = vcmask 130048
    %v162 = vsel %vm160, %v45, 0
    %v165 = vsel %vm160, %v46, 0
    %v168 = vsel %vm160, %v47, 0
    %v171 = vsel %vm160, %v48, 0
    %v174 = vsel %vm160, %v49, 0
    %v177 = vsel %vm160, %v50, 0
    %v180 = vsel %vm160, %v51, 0
    %v183 = vsel %vm160, %v52, 0
    %185 = vmatprep.subr.mxu0 0.0
    %186 = vmatpush1.msra.mxu0 0.0
    %187 = vmatprep.subr.mxu0 0.0
    %188 = vmatpush1.msra.mxu0 0.0
    %189 = vmatprep.subr.mxu0 0.0
    %190 = vmatpush1.msra.mxu0 0.0
    %191 = vmatprep.subr.mxu0 0.0
    %192 = vmatpush1.msra.mxu0 0.0
    %193 = vmatprep.subr.mxu0 0.0
    %194 = vmatpush1.msra.mxu0 0.0
    %195 = vmatprep.subr.mxu0 0.0
    %196 = vmatpush1.msra.mxu0 0.0
    %197 = vmatprep.subr.mxu0 0.0
    %198 = vmatpush1.msra.mxu0 0.0
    %199 = vmatprep.subr.mxu0 0.0
    %200 = vmatpush1.msra.mxu0 0.0
    %201 = vmatprep.subr.mxu0 0.0
    %202 = vmatpush1.msra.mxu0 0.0
    %203 = vmatprep.subr.mxu0 0.0
    %204 = vmatpush1.msra.mxu0 0.0
    %205 = vmatprep.subr.mxu0 0.0
    %206 = vmatpush1.msra.mxu0 0.0
    %207 = vmatprep.subr.mxu0 0.0
    %208 = vmatpush1.msra.mxu0 0.0
    %209 = vmatprep.subr.mxu0 0.0
    %210 = vmatpush1.msra.mxu0 0.0
    %211 = vmatprep.subr.mxu0 0.0
    %212 = vmatpush1.msra.mxu0 0.0
    %213 = vmatprep.subr.mxu0 0.0
    %214 = vmatpush1.msra.mxu0 %v157
    %215 = vmatprep.subr.mxu0 0.0
    %216 = vmatpush1.msra.mxu0 %v152
    %217 = vmatprep.subr.mxu0 0.0
    %218 = vmatpush2.msra.mxu0 0.0
    %219 = vmatprep.subr.mxu0 0.0
    %220 = vmatpush2.msra.mxu0 0.0
    %221 = vmatprep.subr.mxu0 0.0
    %222 = vmatpush2.msra.mxu0 0.0
    %223 = vmatprep.subr.mxu0 0.0
    %224 = vmatpush2.msra.mxu0 0.0
    %225 = vmatprep.subr.mxu0 0.0
    %226 = vmatpush2.msra.mxu0 0.0
    %227 = vmatprep.subr.mxu0 0.0
    %228 = vmatpush2.msra.mxu0 0.0
    %229 = vmatprep.subr.mxu0 0.0
    %230 = vmatpush2.msra.mxu0 0.0
    %231 = vmatprep.subr.mxu0 0.0
    %232 = vmatpush2.msra.mxu0 0.0
    %233 = vmatprep.subr.mxu0 0.0
    %234 = vmatpush2.msra.mxu0 0.0
    %235 = vmatprep.subr.mxu0 0.0
    %236 = vmatpush2.msra.mxu0 0.0
    %237 = vmatprep.subr.mxu0 0.0
    %238 = vmatpush2.msra.mxu0 0.0
    %239 = vmatprep.subr.mxu0 0.0
    %240 = vmatpush2.msra.mxu0 0.0
    %241 = vmatprep.subr.mxu0 0.0
    %242 = vmatpush2.msra.mxu0 0.0
    %243 = vmatprep.subr.mxu0 0.0
    %244 = vmatpush2.msra.mxu0 0.0
    %245 = vmatprep.subr.mxu0 0.0
    %246 = vmatpush2.msra.mxu0 0.0
    %247 = vmatprep.subr.mxu0 0.0
    %248 = vmatpush2.msra.mxu0 0.0
    %249 = vmatprep.mubr.f32.mxu0 0.0
    %250 = vmatmul.mubr.f32.gmra.mxu0 %v162
    %v251 = vpop.f32.mrf.mxu0
    %v252 = vadd.f32 0.0, %v251
    %v253 = vpop.f32.mrf.mxu0
    %254 = vmatprep.mubr.f32.mxu0 0.0
    %255 = vmatmul.mubr.f32.gmra.mxu0 %v165
    %v256 = vpop.f32.mrf.mxu0
    %v257 = vadd.f32 0.0, %v256
    %v258 = vpop.f32.mrf.mxu0
    %259 = vmatprep.mubr.f32.mxu0 0.0
    %260 = vmatmul.mubr.f32.gmra.mxu0 %v168
    %v261 = vpop.f32.mrf.mxu0
    %v262 = vadd.f32 0.0, %v261
    %v263 = vpop.f32.mrf.mxu0
    %264 = vmatprep.mubr.f32.mxu0 0.0
    %265 = vmatmul.mubr.f32.gmra.mxu0 %v171
    %v266 = vpop.f32.mrf.mxu0
    %v267 = vadd.f32 0.0, %v266
    %v268 = vpop.f32.mrf.mxu0
    %269 = vmatprep.mubr.f32.mxu0 0.0
    %270 = vmatmul.mubr.f32.gmra.mxu0 %v174
    %v271 = vpop.f32.mrf.mxu0
    %v272 = vadd.f32 0.0, %v271
    %v273 = vpop.f32.mrf.mxu0
    %274 = vmatprep.mubr.f32.mxu0 0.0
    %275 = vmatmul.mubr.f32.gmra.mxu0 %v177
    %v276 = vpop.f32.mrf.mxu0
    %v277 = vadd.f32 0.0, %v276
    %v278 = vpop.f32.mrf.mxu0
    %279 = vmatprep.mubr.f32.mxu0 0.0
    %280 = vmatmul.mubr.f32.gmra.mxu0 %v180
    %v281 = vpop.f32.mrf.mxu0
    %v282 = vadd.f32 0.0, %v281
    %v283 = vpop.f32.mrf.mxu0
    %284 = vmatprep.mubr.f32.mxu0 0.0
    %285 = vmatmul.mubr.f32.gmra.mxu0 %v183
    %v286 = vpop.f32.mrf.mxu0
    %v287 = vadd.f32 0.0, %v286
    %v288 = vpop.f32.mrf.mxu0
    %289 = vdwg.mxu0
    %v290 = vld [vmem:[%s7] sm:$0xff]
    %v291 = vld [vmem:[%s7 + $0x8] sm:$0xff]
    %v292 = vld [vmem:[%s7 + $0x10] sm:$0xff]
    %v293 = vld [vmem:[%s7 + $0x18] sm:$0xff]
    %294 = vmatprep.subr.mxu0 0.0
    %295 = vmatpush1.msra.mxu0 0.0
    %296 = vmatprep.subr.mxu0 0.0
    %297 = vmatpush1.msra.mxu0 0.0
    %298 = vmatprep.subr.mxu0 0.0
    %299 = vmatpush1.msra.mxu0 0.0
    %300 = vmatprep.subr.mxu0 0.0
    %301 = vmatpush1.msra.mxu0 0.0
    %302 = vmatprep.subr.mxu0 0.0
    %303 = vmatpush1.msra.mxu0 0.0
    %304 = vmatprep.subr.mxu0 0.0
    %305 = vmatpush1.msra.mxu0 0.0
    %306 = vmatprep.subr.mxu0 0.0
    %307 = vmatpush1.msra.mxu0 0.0
    %308 = vmatprep.subr.mxu0 0.0
    %309 = vmatpush1.msra.mxu0 0.0
    %310 = vmatprep.subr.mxu0 0.0
    %311 = vmatpush1.msra.mxu0 0.0
    %312 = vmatprep.subr.mxu0 0.0
    %313 = vmatpush1.msra.mxu0 0.0
    %314 = vmatprep.subr.mxu0 0.0
    %315 = vmatpush1.msra.mxu0 0.0
    %316 = vmatprep.subr.mxu0 0.0
    %317 = vmatpush1.msra.mxu0 0.0
    %318 = vmatprep.subr.mxu0 0.0
    %319 = vmatpush1.msra.mxu0 %v293
    %320 = vmatprep.subr.mxu0 0.0
    %321 = vmatpush1.msra.mxu0 %v292
    %322 = vmatprep.subr.mxu0 0.0
    %323 = vmatpush1.msra.mxu0 %v291
    %324 = vmatprep.subr.mxu0 0.0
    %325 = vmatpush1.msra.mxu0 %v290
    %326 = vmatprep.subr.mxu0 0.0
    %327 = vmatpush2.msra.mxu0 0.0
    %328 = vmatprep.subr.mxu0 0.0
    %329 = vmatpush2.msra.mxu0 0.0
    %330 = vmatprep.subr.mxu0 0.0
    %331 = vmatpush2.msra.mxu0 0.0
    %332 = vmatprep.subr.mxu0 0.0
    %333 = vmatpush2.msra.mxu0 0.0
    %334 = vmatprep.subr.mxu0 0.0
    %335 = vmatpush2.msra.mxu0 0.0
    %336 = vmatprep.subr.mxu0 0.0
    %337 = vmatpush2.msra.mxu0 0.0
    %338 = vmatprep.subr.mxu0 0.0
    %339 = vmatpush2.msra.mxu0 0.0
    %340 = vmatprep.subr.mxu0 0.0
    %341 = vmatpush2.msra.mxu0 0.0
    %342 = vmatprep.subr.mxu0 0.0
    %343 = vmatpush2.msra.mxu0 0.0
    %344 = vmatprep.subr.mxu0 0.0
    %345 = vmatpush2.msra.mxu0 0.0
    %346 = vmatprep.subr.mxu0 0.0
    %347 = vmatpush2.msra.mxu0 0.0
    %348 = vmatprep.subr.mxu0 0.0
    %349 = vmatpush2.msra.mxu0 0.0
    %350 = vmatprep.subr.mxu0 0.0
    %351 = vmatpush2.msra.mxu0 0.0
    %352 = vmatprep.subr.mxu0 0.0
    %353 = vmatpush2.msra.mxu0 0.0
    %354 = vmatprep.subr.mxu0 0.0
    %355 = vmatpush2.msra.mxu0 0.0
    %356 = vmatprep.subr.mxu0 0.0
    %357 = vmatpush2.msra.mxu0 0.0
    %358 = vmatprep.mubr.f32.mxu0 0.0
    %359 = vmatmul.mubr.f32.gmra.mxu0 %v80
    %v360 = vpop.f32.mrf.mxu0
    %v361 = vadd.f32 0.0, %v360
    %v362 = vpop.f32.mrf.mxu0
    %363 = vmatprep.mubr.f32.mxu0 0.0
    %364 = vmatmul.mubr.f32.gmra.mxu0 %v83
    %v365 = vpop.f32.mrf.mxu0
    %v366 = vadd.f32 0.0, %v365
    %v367 = vpop.f32.mrf.mxu0
    %368 = vdwg.mxu0
    %v370 = vsel %vm160, %v55, 0
    %v373 = vsel %vm160, %v56, 0
    %v376 = vsel %vm160, %v57, 0
    %v379 = vsel %vm160, %v58, 0
    %v382 = vsel %vm160, %v59, 0
    %v385 = vsel %vm160, %v60, 0
    %v388 = vsel %vm160, %v61, 0
    %v391 = vsel %vm160, %v62, 0
    %393 = vmatprep.subr.mxu0 0.0
    %394 = vmatpush1.msra.mxu0 0.0
    %395 = vmatprep.subr.mxu0 0.0
    %396 = vmatpush1.msra.mxu0 0.0
    %397 = vmatprep.subr.mxu0 0.0
    %398 = vmatpush1.msra.mxu0 0.0
    %399 = vmatprep.subr.mxu0 0.0
    %400 = vmatpush1.msra.mxu0 0.0
    %401 = vmatprep.subr.mxu0 0.0
    %402 = vmatpush1.msra.mxu0 0.0
    %403 = vmatprep.subr.mxu0 0.0
    %404 = vmatpush1.msra.mxu0 0.0
    %405 = vmatprep.subr.mxu0 0.0
    %406 = vmatpush1.msra.mxu0 0.0
    %407 = vmatprep.subr.mxu0 0.0
    %408 = vmatpush1.msra.mxu0 0.0
    %409 = vmatprep.subr.mxu0 0.0
    %410 = vmatpush1.msra.mxu0 0.0
    %411 = vmatprep.subr.mxu0 0.0
    %412 = vmatpush1.msra.mxu0 0.0
    %413 = vmatprep.subr.mxu0 0.0
    %414 = vmatpush1.msra.mxu0 0.0
    %415 = vmatprep.subr.mxu0 0.0
    %416 = vmatpush1.msra.mxu0 0.0
    %417 = vmatprep.subr.mxu0 0.0
    %418 = vmatpush1.msra.mxu0 0.0
    %419 = vmatprep.subr.mxu0 0.0
    %420 = vmatpush1.msra.mxu0 0.0
    %421 = vmatprep.subr.mxu0 0.0
    %422 = vmatpush1.msra.mxu0 %v366
    %423 = vmatprep.subr.mxu0 0.0
    %424 = vmatpush1.msra.mxu0 %v361
    %425 = vmatprep.subr.mxu0 0.0
    %426 = vmatpush2.msra.mxu0 0.0
    %427 = vmatprep.subr.mxu0 0.0
    %428 = vmatpush2.msra.mxu0 0.0
    %429 = vmatprep.subr.mxu0 0.0
    %430 = vmatpush2.msra.mxu0 0.0
    %431 = vmatprep.subr.mxu0 0.0
    %432 = vmatpush2.msra.mxu0 0.0
    %433 = vmatprep.subr.mxu0 0.0
    %434 = vmatpush2.msra.mxu0 0.0
    %435 = vmatprep.subr.mxu0 0.0
    %436 = vmatpush2.msra.mxu0 0.0
    %437 = vmatprep.subr.mxu0 0.0
    %438 = vmatpush2.msra.mxu0 0.0
    %439 = vmatprep.subr.mxu0 0.0
    %440 = vmatpush2.msra.mxu0 0.0
    %441 = vmatprep.subr.mxu0 0.0
    %442 = vmatpush2.msra.mxu0 0.0
    %443 = vmatprep.subr.mxu0 0.0
    %444 = vmatpush2.msra.mxu0 0.0
    %445 = vmatprep.subr.mxu0 0.0
    %446 = vmatpush2.msra.mxu0 0.0
    %447 = vmatprep.subr.mxu0 0.0
    %448 = vmatpush2.msra.mxu0 0.0
    %449 = vmatprep.subr.mxu0 0.0
    %450 = vmatpush2.msra.mxu0 0.0
    %451 = vmatprep.subr.mxu0 0.0
    %452 = vmatpush2.msra.mxu0 0.0
    %453 = vmatprep.subr.mxu0 0.0
    %454 = vmatpush2.msra.mxu0 0.0
    %455 = vmatprep.subr.mxu0 0.0
    %456 = vmatpush2.msra.mxu0 0.0
    %457 = vmatprep.mubr.f32.mxu0 0.0
    %458 = vmatmul.mubr.f32.gmra.mxu0 %v370
    %v459 = vpop.f32.mrf.mxu0
    %v460 = vadd.f32 0.0, %v459
    %v461 = vpop.f32.mrf.mxu0
    %462 = vmatprep.mubr.f32.mxu0 0.0
    %463 = vmatmul.mubr.f32.gmra.mxu0 %v373
    %v464 = vpop.f32.mrf.mxu0
    %v465 = vadd.f32 0.0, %v464
    %v466 = vpop.f32.mrf.mxu0
    %467 = vmatprep.mubr.f32.mxu0 0.0
    %468 = vmatmul.mubr.f32.gmra.mxu0 %v376
    %v469 = vpop.f32.mrf.mxu0
    %v470 = vadd.f32 0.0, %v469
    %v471 = vpop.f32.mrf.mxu0
    %472 = vmatprep.mubr.f32.mxu0 0.0
    %473 = vmatmul.mubr.f32.gmra.mxu0 %v379
    %v474 = vpop.f32.mrf.mxu0
    %v475 = vadd.f32 0.0, %v474
    %v476 = vpop.f32.mrf.mxu0
    %477 = vmatprep.mubr.f32.mxu0 0.0
    %478 = vmatmul.mubr.f32.gmra.mxu0 %v382
    %v479 = vpop.f32.mrf.mxu0
    %v480 = vadd.f32 0.0, %v479
    %v481 = vpop.f32.mrf.mxu0
    %482 = vmatprep.mubr.f32.mxu0 0.0
    %483 = vmatmul.mubr.f32.gmra.mxu0 %v385
    %v484 = vpop.f32.mrf.mxu0
    %v485 = vadd.f32 0.0, %v484
    %v486 = vpop.f32.mrf.mxu0
    %487 = vmatprep.mubr.f32.mxu0 0.0
    %488 = vmatmul.mubr.f32.gmra.mxu0 %v388
    %v489 = vpop.f32.mrf.mxu0
    %v490 = vadd.f32 0.0, %v489
    %v491 = vpop.f32.mrf.mxu0
    %492 = vmatprep.mubr.f32.mxu0 0.0
    %493 = vmatmul.mubr.f32.gmra.mxu0 %v391
    %v494 = vpop.f32.mrf.mxu0
    %v495 = vadd.f32 0.0, %v494
    %v496 = vpop.f32.mrf.mxu0
    %497 = vdwg.mxu0
    %v498 = vld [vmem:[%s8] sm:$0xff]
    %v499 = vld [vmem:[%s8 + $0x8] sm:$0xff]
    %v500 = vld [vmem:[%s8 + $0x10] sm:$0xff]
    %v501 = vld [vmem:[%s8 + $0x18] sm:$0xff]
    %v503 = vsel %vm78, %v73, 0
    %505 = vmatprep.subr.mxu0 0.0
    %506 = vmatpush1.msra.mxu0 0.0
    %507 = vmatprep.subr.mxu0 0.0
    %508 = vmatpush1.msra.mxu0 0.0
    %509 = vmatprep.subr.mxu0 0.0
    %510 = vmatpush1.msra.mxu0 0.0
    %511 = vmatprep.subr.mxu0 0.0
    %512 = vmatpush1.msra.mxu0 0.0
    %513 = vmatprep.subr.mxu0 0.0
    %514 = vmatpush1.msra.mxu0 0.0
    %515 = vmatprep.subr.mxu0 0.0
    %516 = vmatpush1.msra.mxu0 0.0
    %517 = vmatprep.subr.mxu0 0.0
    %518 = vmatpush1.msra.mxu0 0.0
    %519 = vmatprep.subr.mxu0 0.0
    %520 = vmatpush1.msra.mxu0 0.0
    %521 = vmatprep.subr.mxu0 0.0
    %522 = vmatpush1.msra.mxu0 0.0
    %523 = vmatprep.subr.mxu0 0.0
    %524 = vmatpush1.msra.mxu0 0.0
    %525 = vmatprep.subr.mxu0 0.0
    %526 = vmatpush1.msra.mxu0 0.0
    %527 = vmatprep.subr.mxu0 0.0
    %528 = vmatpush1.msra.mxu0 0.0
    %529 = vmatprep.subr.mxu0 0.0
    %530 = vmatpush1.msra.mxu0 %v501
    %531 = vmatprep.subr.mxu0 0.0
    %532 = vmatpush1.msra.mxu0 %v500
    %533 = vmatprep.subr.mxu0 0.0
    %534 = vmatpush1.msra.mxu0 %v499
    %535 = vmatprep.subr.mxu0 0.0
    %536 = vmatpush1.msra.mxu0 %v498
    %537 = vmatprep.subr.mxu0 0.0
    %538 = vmatpush2.msra.mxu0 0.0
    %539 = vmatprep.subr.mxu0 0.0
    %540 = vmatpush2.msra.mxu0 0.0
    %541 = vmatprep.subr.mxu0 0.0
    %542 = vmatpush2.msra.mxu0 0.0
    %543 = vmatprep.subr.mxu0 0.0
    %544 = vmatpush2.msra.mxu0 0.0
    %545 = vmatprep.subr.mxu0 0.0
    %546 = vmatpush2.msra.mxu0 0.0
    %547 = vmatprep.subr.mxu0 0.0
    %548 = vmatpush2.msra.mxu0 0.0
    %549 = vmatprep.subr.mxu0 0.0
    %550 = vmatpush2.msra.mxu0 0.0
    %551 = vmatprep.subr.mxu0 0.0
    %552 = vmatpush2.msra.mxu0 0.0
    %553 = vmatprep.subr.mxu0 0.0
    %554 = vmatpush2.msra.mxu0 0.0
    %555 = vmatprep.subr.mxu0 0.0
    %556 = vmatpush2.msra.mxu0 0.0
    %557 = vmatprep.subr.mxu0 0.0
    %558 = vmatpush2.msra.mxu0 0.0
    %559 = vmatprep.subr.mxu0 0.0
    %560 = vmatpush2.msra.mxu0 0.0
    %561 = vmatprep.subr.mxu0 0.0
    %562 = vmatpush2.msra.mxu0 0.0
    %563 = vmatprep.subr.mxu0 0.0
    %564 = vmatpush2.msra.mxu0 0.0
    %565 = vmatprep.subr.mxu0 0.0
    %566 = vmatpush2.msra.mxu0 0.0
    %567 = vmatprep.subr.mxu0 0.0
    %568 = vmatpush2.msra.mxu0 0.0
    %569 = vmatprep.mubr.f32.mxu0 0.0
    %570 = vmatmul.mubr.f32.gmra.mxu0 %v503
    %v571 = vpop.f32.mrf.mxu0
    %v572 = vadd.f32 0.0, %v571
    %v573 = vpop.f32.mrf.mxu0
    %574 = vdwg.mxu0
    %vm575 = vcmask 64512
    %v577 = vsel %vm575, %v63, 0
    %v580 = vsel %vm575, %v64, 0
    %v583 = vsel %vm575, %v65, 0
    %v586 = vsel %vm575, %v66, 0
    %v589 = vsel %vm575, %v67, 0
    %v592 = vsel %vm575, %v68, 0
    %v595 = vsel %vm575, %v69, 0
    %v598 = vsel %vm575, %v70, 0
    %600 = vmatprep.subr.mxu0 0.0
    %601 = vmatpush1.msra.mxu0 0.0
    %602 = vmatprep.subr.mxu0 0.0
    %603 = vmatpush1.msra.mxu0 0.0
    %604 = vmatprep.subr.mxu0 0.0
    %605 = vmatpush1.msra.mxu0 0.0
    %606 = vmatprep.subr.mxu0 0.0
    %607 = vmatpush1.msra.mxu0 0.0
    %608 = vmatprep.subr.mxu0 0.0
    %609 = vmatpush1.msra.mxu0 0.0
    %610 = vmatprep.subr.mxu0 0.0
    %611 = vmatpush1.msra.mxu0 0.0
    %612 = vmatprep.subr.mxu0 0.0
    %613 = vmatpush1.msra.mxu0 0.0
    %614 = vmatprep.subr.mxu0 0.0
    %615 = vmatpush1.msra.mxu0 0.0
    %616 = vmatprep.subr.mxu0 0.0
    %617 = vmatpush1.msra.mxu0 0.0
    %618 = vmatprep.subr.mxu0 0.0
    %619 = vmatpush1.msra.mxu0 0.0
    %620 = vmatprep.subr.mxu0 0.0
    %621 = vmatpush1.msra.mxu0 0.0
    %622 = vmatprep.subr.mxu0 0.0
    %623 = vmatpush1.msra.mxu0 0.0
    %624 = vmatprep.subr.mxu0 0.0
    %625 = vmatpush1.msra.mxu0 0.0
    %626 = vmatprep.subr.mxu0 0.0
    %627 = vmatpush1.msra.mxu0 0.0
    %628 = vmatprep.subr.mxu0 0.0
    %629 = vmatpush1.msra.mxu0 0.0
    %630 = vmatprep.subr.mxu0 0.0
    %631 = vmatpush1.msra.mxu0 %v572
    %632 = vmatprep.subr.mxu0 0.0
    %633 = vmatpush2.msra.mxu0 0.0
    %634 = vmatprep.subr.mxu0 0.0
    %635 = vmatpush2.msra.mxu0 0.0
    %636 = vmatprep.subr.mxu0 0.0
    %637 = vmatpush2.msra.mxu0 0.0
    %638 = vmatprep.subr.mxu0 0.0
    %639 = vmatpush2.msra.mxu0 0.0
    %640 = vmatprep.subr.mxu0 0.0
    %641 = vmatpush2.msra.mxu0 0.0
    %642 = vmatprep.subr.mxu0 0.0
    %643 = vmatpush2.msra.mxu0 0.0
    %644 = vmatprep.subr.mxu0 0.0
    %645 = vmatpush2.msra.mxu0 0.0
    %646 = vmatprep.subr.mxu0 0.0
    %647 = vmatpush2.msra.mxu0 0.0
    %648 = vmatprep.subr.mxu0 0.0
    %649 = vmatpush2.msra.mxu0 0.0
    %650 = vmatprep.subr.mxu0 0.0
    %651 = vmatpush2.msra.mxu0 0.0
    %652 = vmatprep.subr.mxu0 0.0
    %653 = vmatpush2.msra.mxu0 0.0
    %654 = vmatprep.subr.mxu0 0.0
    %655 = vmatpush2.msra.mxu0 0.0
    %656 = vmatprep.subr.mxu0 0.0
    %657 = vmatpush2.msra.mxu0 0.0
    %658 = vmatprep.subr.mxu0 0.0
    %659 = vmatpush2.msra.mxu0 0.0
    %660 = vmatprep.subr.mxu0 0.0
    %661 = vmatpush2.msra.mxu0 0.0
    %662 = vmatprep.subr.mxu0 0.0
    %663 = vmatpush2.msra.mxu0 0.0
    %664 = vmatprep.mubr.f32.mxu0 0.0
    %665 = vmatmul.mubr.f32.gmra.mxu0 %v577
    %v666 = vpop.f32.mrf.mxu0
    %v667 = vadd.f32 0.0, %v666
    %v668 = vpop.f32.mrf.mxu0
    %669 = vmatprep.mubr.f32.mxu0 0.0
    %670 = vmatmul.mubr.f32.gmra.mxu0 %v580
    %v671 = vpop.f32.mrf.mxu0
    %v672 = vadd.f32 0.0, %v671
    %v673 = vpop.f32.mrf.mxu0
    %674 = vmatprep.mubr.f32.mxu0 0.0
    %675 = vmatmul.mubr.f32.gmra.mxu0 %v583
    %v676 = vpop.f32.mrf.mxu0
    %v677 = vadd.f32 0.0, %v676
    %v678 = vpop.f32.mrf.mxu0
    %679 = vmatprep.mubr.f32.mxu0 0.0
    %680 = vmatmul.mubr.f32.gmra.mxu0 %v586
    %v681 = vpop.f32.mrf.mxu0
    %v682 = vadd.f32 0.0, %v681
    %v683 = vpop.f32.mrf.mxu0
    %684 = vmatprep.mubr.f32.mxu0 0.0
    %685 = vmatmul.mubr.f32.gmra.mxu0 %v589
    %v686 = vpop.f32.mrf.mxu0
    %v687 = vadd.f32 0.0, %v686
    %v688 = vpop.f32.mrf.mxu0
    %689 = vmatprep.mubr.f32.mxu0 0.0
    %690 = vmatmul.mubr.f32.gmra.mxu0 %v592
    %v691 = vpop.f32.mrf.mxu0
    %v692 = vadd.f32 0.0, %v691
    %v693 = vpop.f32.mrf.mxu0
    %694 = vmatprep.mubr.f32.mxu0 0.0
    %695 = vmatmul.mubr.f32.gmra.mxu0 %v595
    %v696 = vpop.f32.mrf.mxu0
    %v697 = vadd.f32 0.0, %v696
    %v698 = vpop.f32.mrf.mxu0
    %699 = vmatprep.mubr.f32.mxu0 0.0
    %700 = vmatmul.mubr.f32.gmra.mxu0 %v598
    %v701 = vpop.f32.mrf.mxu0
    %v702 = vadd.f32 0.0, %v701
    %v703 = vpop.f32.mrf.mxu0
    %704 = vdwg.mxu0
    %v705 = vtanh.pop %v252
    %v706 = vtanh.pop %v257
    %v707 = vtanh.pop %v262
    %v708 = vtanh.pop %v267
    %v709 = vtanh.pop %v272
    %v710 = vtanh.pop %v277
    %v711 = vtanh.pop %v282
    %v712 = vtanh.pop %v287
    %v713 = vld [vmem:[%s9] sm:$0xff]
    %v714 = vld [vmem:[%s9 + $0x8] sm:$0xff]
    %v715 = vld [vmem:[%s9 + $0x10] sm:$0xff]
    %v716 = vld [vmem:[%s9 + $0x18] sm:$0xff]
    %v717 = vld [vmem:[%s9 + $0x20] sm:$0xff]
    %v718 = vld [vmem:[%s9 + $0x28] sm:$0xff]
    %v719 = vld [vmem:[%s9 + $0x30] sm:$0xff]
    %v720 = vld [vmem:[%s9 + $0x38] sm:$0xff]
    %v721 = vtanh.pop %v460
    %v722 = vtanh.pop %v465
    %v723 = vtanh.pop %v470
    %v724 = vtanh.pop %v475
    %v725 = vtanh.pop %v480
    %v726 = vtanh.pop %v485
    %v727 = vtanh.pop %v490
    %v728 = vtanh.pop %v495
    %v729 = vld [vmem:[%s10] sm:$0xff]
    %v730 = vld [vmem:[%s10 + $0x8] sm:$0xff]
    %v731 = vld [vmem:[%s10 + $0x10] sm:$0xff]
    %v732 = vld [vmem:[%s10 + $0x18] sm:$0xff]
    %v733 = vld [vmem:[%s10 + $0x20] sm:$0xff]
    %v734 = vld [vmem:[%s10 + $0x28] sm:$0xff]
    %v735 = vld [vmem:[%s10 + $0x30] sm:$0xff]
    %v736 = vld [vmem:[%s10 + $0x38] sm:$0xff]
    %vm737 = vcmask 523264
    %v739 = vsel %vm737, %v721, 0
    %v742 = vsel %vm737, %v722, 0
    %v745 = vsel %vm737, %v723, 0
    %v748 = vsel %vm737, %v724, 0
    %v751 = vsel %vm737, %v725, 0
    %v754 = vsel %vm737, %v726, 0
    %v757 = vsel %vm737, %v727, 0
    %v760 = vsel %vm737, %v728, 0
    %762 = vmatprep.subr.mxu0 0.0
    %763 = vmatpush1.msra.mxu0 0.0
    %764 = vmatprep.subr.mxu0 0.0
    %765 = vmatpush1.msra.mxu0 0.0
    %766 = vmatprep.subr.mxu0 0.0
    %767 = vmatpush1.msra.mxu0 0.0
    %768 = vmatprep.subr.mxu0 0.0
    %769 = vmatpush1.msra.mxu0 0.0
    %770 = vmatprep.subr.mxu0 0.0
    %771 = vmatpush1.msra.mxu0 0.0
    %772 = vmatprep.subr.mxu0 0.0
    %773 = vmatpush1.msra.mxu0 0.0
    %774 = vmatprep.subr.mxu0 0.0
    %775 = vmatpush1.msra.mxu0 0.0
    %776 = vmatprep.subr.mxu0 0.0
    %777 = vmatpush1.msra.mxu0 0.0
    %778 = vmatprep.subr.mxu0 0.0
    %779 = vmatpush1.msra.mxu0 %v736
    %780 = vmatprep.subr.mxu0 0.0
    %781 = vmatpush1.msra.mxu0 %v735
    %782 = vmatprep.subr.mxu0 0.0
    %783 = vmatpush1.msra.mxu0 %v734
    %784 = vmatprep.subr.mxu0 0.0
    %785 = vmatpush1.msra.mxu0 %v733
    %786 = vmatprep.subr.mxu0 0.0
    %787 = vmatpush1.msra.mxu0 %v732
    %788 = vmatprep.subr.mxu0 0.0
    %789 = vmatpush1.msra.mxu0 %v731
    %790 = vmatprep.subr.mxu0 0.0
    %791 = vmatpush1.msra.mxu0 %v730
    %792 = vmatprep.subr.mxu0 0.0
    %793 = vmatpush1.msra.mxu0 %v729
    %794 = vmatprep.subr.mxu0 0.0
    %795 = vmatpush2.msra.mxu0 0.0
    %796 = vmatprep.subr.mxu0 0.0
    %797 = vmatpush2.msra.mxu0 0.0
    %798 = vmatprep.subr.mxu0 0.0
    %799 = vmatpush2.msra.mxu0 0.0
    %800 = vmatprep.subr.mxu0 0.0
    %801 = vmatpush2.msra.mxu0 0.0
    %802 = vmatprep.subr.mxu0 0.0
    %803 = vmatpush2.msra.mxu0 0.0
    %804 = vmatprep.subr.mxu0 0.0
    %805 = vmatpush2.msra.mxu0 0.0
    %806 = vmatprep.subr.mxu0 0.0
    %807 = vmatpush2.msra.mxu0 0.0
    %808 = vmatprep.subr.mxu0 0.0
    %809 = vmatpush2.msra.mxu0 0.0
    %810 = vmatprep.subr.mxu0 0.0
    %811 = vmatpush2.msra.mxu0 0.0
    %812 = vmatprep.subr.mxu0 0.0
    %813 = vmatpush2.msra.mxu0 0.0
    %814 = vmatprep.subr.mxu0 0.0
    %815 = vmatpush2.msra.mxu0 0.0
    %816 = vmatprep.subr.mxu0 0.0
    %817 = vmatpush2.msra.mxu0 0.0
    %818 = vmatprep.subr.mxu0 0.0
    %819 = vmatpush2.msra.mxu0 0.0
    %820 = vmatprep.subr.mxu0 0.0
    %821 = vmatpush2.msra.mxu0 0.0
    %822 = vmatprep.subr.mxu0 0.0
    %823 = vmatpush2.msra.mxu0 0.0
    %824 = vmatprep.subr.mxu0 0.0
    %825 = vmatpush2.msra.mxu0 0.0
    %826 = vmatprep.mubr.f32.mxu0 0.0
    %827 = vmatmul.mubr.f32.gmra.mxu0 %v739
    %v828 = vpop.f32.mrf.mxu0
    %v829 = vadd.f32 0.0, %v828
    %v830 = vpop.f32.mrf.mxu0
    %831 = vmatprep.mubr.f32.mxu0 0.0
    %832 = vmatmul.mubr.f32.gmra.mxu0 %v742
    %v833 = vpop.f32.mrf.mxu0
    %v834 = vadd.f32 0.0, %v833
    %v835 = vpop.f32.mrf.mxu0
    %836 = vmatprep.mubr.f32.mxu0 0.0
    %837 = vmatmul.mubr.f32.gmra.mxu0 %v745
    %v838 = vpop.f32.mrf.mxu0
    %v839 = vadd.f32 0.0, %v838
    %v840 = vpop.f32.mrf.mxu0
    %841 = vmatprep.mubr.f32.mxu0 0.0
    %842 = vmatmul.mubr.f32.gmra.mxu0 %v748
    %v843 = vpop.f32.mrf.mxu0
    %v844 = vadd.f32 0.0, %v843
    %v845 = vpop.f32.mrf.mxu0
    %846 = vmatprep.mubr.f32.mxu0 0.0
    %847 = vmatmul.mubr.f32.gmra.mxu0 %v751
    %v848 = vpop.f32.mrf.mxu0
    %v849 = vadd.f32 0.0, %v848
    %v850 = vpop.f32.mrf.mxu0
    %851 = vmatprep.mubr.f32.mxu0 0.0
    %852 = vmatmul.mubr.f32.gmra.mxu0 %v754
    %v853 = vpop.f32.mrf.mxu0
    %v854 = vadd.f32 0.0, %v853
    %v855 = vpop.f32.mrf.mxu0
    %856 = vmatprep.mubr.f32.mxu0 0.0
    %857 = vmatmul.mubr.f32.gmra.mxu0 %v757
    %v858 = vpop.f32.mrf.mxu0
    %v859 = vadd.f32 0.0, %v858
    %v860 = vpop.f32.mrf.mxu0
    %861 = vmatprep.mubr.f32.mxu0 0.0
    %862 = vmatmul.mubr.f32.gmra.mxu0 %v760
    %v863 = vpop.f32.mrf.mxu0
    %v864 = vadd.f32 0.0, %v863
    %v865 = vpop.f32.mrf.mxu0
    %866 = vdwg.mxu0
    %v868 = vsel %vm737, %v705, 0
    %v871 = vsel %vm737, %v706, 0
    %v874 = vsel %vm737, %v707, 0
    %v877 = vsel %vm737, %v708, 0
    %v880 = vsel %vm737, %v709, 0
    %v883 = vsel %vm737, %v710, 0
    %v886 = vsel %vm737, %v711, 0
    %v889 = vsel %vm737, %v712, 0
    %891 = vmatprep.subr.mxu0 0.0
    %892 = vmatpush1.msra.mxu0 0.0
    %893 = vmatprep.subr.mxu0 0.0
    %894 = vmatpush1.msra.mxu0 0.0
    %895 = vmatprep.subr.mxu0 0.0
    %896 = vmatpush1.msra.mxu0 0.0
    %897 = vmatprep.subr.mxu0 0.0
    %898 = vmatpush1.msra.mxu0 0.0
    %899 = vmatprep.subr.mxu0 0.0
    %900 = vmatpush1.msra.mxu0 0.0
    %901 = vmatprep.subr.mxu0 0.0
    %902 = vmatpush1.msra.mxu0 0.0
    %903 = vmatprep.subr.mxu0 0.0
    %904 = vmatpush1.msra.mxu0 0.0
    %905 = vmatprep.subr.mxu0 0.0
    %906 = vmatpush1.msra.mxu0 0.0
    %907 = vmatprep.subr.mxu0 0.0
    %908 = vmatpush1.msra.mxu0 %v720
    %909 = vmatprep.subr.mxu0 0.0
    %910 = vmatpush1.msra.mxu0 %v719
    %911 = vmatprep.subr.mxu0 0.0
    %912 = vmatpush1.msra.mxu0 %v718
    %913 = vmatprep.subr.mxu0 0.0
    %914 = vmatpush1.msra.mxu0 %v717
    %915 = vmatprep.subr.mxu0 0.0
    %916 = vmatpush1.msra.mxu0 %v716
    %917 = vmatprep.subr.mxu0 0.0
    %918 = vmatpush1.msra.mxu0 %v715
    %919 = vmatprep.subr.mxu0 0.0
    %920 = vmatpush1.msra.mxu0 %v714
    %921 = vmatprep.subr.mxu0 0.0
    %922 = vmatpush1.msra.mxu0 %v713
    %923 = vmatprep.subr.mxu0 0.0
    %924 = vmatpush2.msra.mxu0 0.0
    %925 = vmatprep.subr.mxu0 0.0
    %926 = vmatpush2.msra.mxu0 0.0
    %927 = vmatprep.subr.mxu0 0.0
    %928 = vmatpush2.msra.mxu0 0.0
    %929 = vmatprep.subr.mxu0 0.0
    %930 = vmatpush2.msra.mxu0 0.0
    %931 = vmatprep.subr.mxu0 0.0
    %932 = vmatpush2.msra.mxu0 0.0
    %933 = vmatprep.subr.mxu0 0.0
    %934 = vmatpush2.msra.mxu0 0.0
    %935 = vmatprep.subr.mxu0 0.0
    %936 = vmatpush2.msra.mxu0 0.0
    %937 = vmatprep.subr.mxu0 0.0
    %938 = vmatpush2.msra.mxu0 0.0
    %939 = vmatprep.subr.mxu0 0.0
    %940 = vmatpush2.msra.mxu0 0.0
    %941 = vmatprep.subr.mxu0 0.0
    %942 = vmatpush2.msra.mxu0 0.0
    %943 = vmatprep.subr.mxu0 0.0
    %944 = vmatpush2.msra.mxu0 0.0
    %945 = vmatprep.subr.mxu0 0.0
    %946 = vmatpush2.msra.mxu0 0.0
    %947 = vmatprep.subr.mxu0 0.0
    %948 = vmatpush2.msra.mxu0 0.0
    %949 = vmatprep.subr.mxu0 0.0
    %950 = vmatpush2.msra.mxu0 0.0
    %951 = vmatprep.subr.mxu0 0.0
    %952 = vmatpush2.msra.mxu0 0.0
    %953 = vmatprep.subr.mxu0 0.0
    %954 = vmatpush2.msra.mxu0 0.0
    %955 = vmatprep.mubr.f32.mxu0 0.0
    %956 = vmatmul.mubr.f32.gmra.mxu0 %v868
    %v957 = vpop.f32.mrf.mxu0
    %v958 = vadd.f32 %v829, %v957
    %v959 = vpop.f32.mrf.mxu0
    %960 = vmatprep.mubr.f32.mxu0 0.0
    %961 = vmatmul.mubr.f32.gmra.mxu0 %v871
    %v962 = vpop.f32.mrf.mxu0
    %v963 = vadd.f32 %v834, %v962
    %v964 = vpop.f32.mrf.mxu0
    %965 = vmatprep.mubr.f32.mxu0 0.0
    %966 = vmatmul.mubr.f32.gmra.mxu0 %v874
    %v967 = vpop.f32.mrf.mxu0
    %v968 = vadd.f32 %v839, %v967
    %v969 = vpop.f32.mrf.mxu0
    %970 = vmatprep.mubr.f32.mxu0 0.0
    %971 = vmatmul.mubr.f32.gmra.mxu0 %v877
    %v972 = vpop.f32.mrf.mxu0
    %v973 = vadd.f32 %v844, %v972
    %v974 = vpop.f32.mrf.mxu0
    %975 = vmatprep.mubr.f32.mxu0 0.0
    %976 = vmatmul.mubr.f32.gmra.mxu0 %v880
    %v977 = vpop.f32.mrf.mxu0
    %v978 = vadd.f32 %v849, %v977
    %v979 = vpop.f32.mrf.mxu0
    %980 = vmatprep.mubr.f32.mxu0 0.0
    %981 = vmatmul.mubr.f32.gmra.mxu0 %v883
    %v982 = vpop.f32.mrf.mxu0
    %v983 = vadd.f32 %v854, %v982
    %v984 = vpop.f32.mrf.mxu0
    %985 = vmatprep.mubr.f32.mxu0 0.0
    %986 = vmatmul.mubr.f32.gmra.mxu0 %v886
    %v987 = vpop.f32.mrf.mxu0
    %v988 = vadd.f32 %v859, %v987
    %v989 = vpop.f32.mrf.mxu0
    %990 = vmatprep.mubr.f32.mxu0 0.0
    %991 = vmatmul.mubr.f32.gmra.mxu0 %v889
    %v992 = vpop.f32.mrf.mxu0
    %v993 = vadd.f32 %v864, %v992
    %v994 = vpop.f32.mrf.mxu0
    %995 = vdwg.mxu0
    %v996 = vtanh.pop %v667
    %v997 = vtanh.pop %v672
    %v998 = vtanh.pop %v677
    %v999 = vtanh.pop %v682
    %v1000 = vtanh.pop %v687
    %v1001 = vtanh.pop %v692
    %v1002 = vtanh.pop %v697
    %v1003 = vtanh.pop %v702
    %v1004 = vld [vmem:[%s11] sm:$0xff]
    %v1005 = vld [vmem:[%s11 + $0x8] sm:$0xff]
    %v1006 = vld [vmem:[%s11 + $0x10] sm:$0xff]
    %v1007 = vld [vmem:[%s11 + $0x18] sm:$0xff]
    %v1008 = vld [vmem:[%s11 + $0x20] sm:$0xff]
    %v1009 = vld [vmem:[%s11 + $0x28] sm:$0xff]
    %v1010 = vld [vmem:[%s11 + $0x30] sm:$0xff]
    %v1011 = vld [vmem:[%s11 + $0x38] sm:$0xff]
    %v1013 = vsel %vm737, %v996, 0
    %v1016 = vsel %vm737, %v997, 0
    %v1019 = vsel %vm737, %v998, 0
    %v1022 = vsel %vm737, %v999, 0
    %v1025 = vsel %vm737, %v1000, 0
    %v1028 = vsel %vm737, %v1001, 0
    %v1031 = vsel %vm737, %v1002, 0
    %v1034 = vsel %vm737, %v1003, 0
    %1036 = vmatprep.subr.mxu0 0.0
    %1037 = vmatpush1.msra.mxu0 0.0
    %1038 = vmatprep.subr.mxu0 0.0
    %1039 = vmatpush1.msra.mxu0 0.0
    %1040 = vmatprep.subr.mxu0 0.0
    %1041 = vmatpush1.msra.mxu0 0.0
    %1042 = vmatprep.subr.mxu0 0.0
    %1043 = vmatpush1.msra.mxu0 0.0
    %1044 = vmatprep.subr.mxu0 0.0
    %1045 = vmatpush1.msra.mxu0 0.0
    %1046 = vmatprep.subr.mxu0 0.0
    %1047 = vmatpush1.msra.mxu0 0.0
    %1048 = vmatprep.subr.mxu0 0.0
    %1049 = vmatpush1.msra.mxu0 0.0
    %1050 = vmatprep.subr.mxu0 0.0
    %1051 = vmatpush1.msra.mxu0 0.0
    %1052 = vmatprep.subr.mxu0 0.0
    %1053 = vmatpush1.msra.mxu0 %v1011
    %1054 = vmatprep.subr.mxu0 0.0
    %1055 = vmatpush1.msra.mxu0 %v1010
    %1056 = vmatprep.subr.mxu0 0.0
    %1057 = vmatpush1.msra.mxu0 %v1009
    %1058 = vmatprep.subr.mxu0 0.0
    %1059 = vmatpush1.msra.mxu0 %v1008
    %1060 = vmatprep.subr.mxu0 0.0
    %1061 = vmatpush1.msra.mxu0 %v1007
    %1062 = vmatprep.subr.mxu0 0.0
    %1063 = vmatpush1.msra.mxu0 %v1006
    %1064 = vmatprep.subr.mxu0 0.0
    %1065 = vmatpush1.msra.mxu0 %v1005
    %1066 = vmatprep.subr.mxu0 0.0
    %1067 = vmatpush1.msra.mxu0 %v1004
    %1068 = vmatprep.subr.mxu0 0.0
    %1069 = vmatpush2.msra.mxu0 0.0
    %1070 = vmatprep.subr.mxu0 0.0
    %1071 = vmatpush2.msra.mxu0 0.0
    %1072 = vmatprep.subr.mxu0 0.0
    %1073 = vmatpush2.msra.mxu0 0.0
    %1074 = vmatprep.subr.mxu0 0.0
    %1075 = vmatpush2.msra.mxu0 0.0
    %1076 = vmatprep.subr.mxu0 0.0
    %1077 = vmatpush2.msra.mxu0 0.0
    %1078 = vmatprep.subr.mxu0 0.0
    %1079 = vmatpush2.msra.mxu0 0.0
    %1080 = vmatprep.subr.mxu0 0.0
    %1081 = vmatpush2.msra.mxu0 0.0
    %1082 = vmatprep.subr.mxu0 0.0
    %1083 = vmatpush2.msra.mxu0 0.0
    %1084 = vmatprep.subr.mxu0 0.0
    %1085 = vmatpush2.msra.mxu0 0.0
    %1086 = vmatprep.subr.mxu0 0.0
    %1087 = vmatpush2.msra.mxu0 0.0
    %1088 = vmatprep.subr.mxu0 0.0
    %1089 = vmatpush2.msra.mxu0 0.0
    %1090 = vmatprep.subr.mxu0 0.0
    %1091 = vmatpush2.msra.mxu0 0.0
    %1092 = vmatprep.subr.mxu0 0.0
    %1093 = vmatpush2.msra.mxu0 0.0
    %1094 = vmatprep.subr.mxu0 0.0
    %1095 = vmatpush2.msra.mxu0 0.0
    %1096 = vmatprep.subr.mxu0 0.0
    %1097 = vmatpush2.msra.mxu0 0.0
    %1098 = vmatprep.subr.mxu0 0.0
    %1099 = vmatpush2.msra.mxu0 0.0
    %1100 = vmatprep.mubr.f32.mxu0 0.0
    %1101 = vmatmul.mubr.f32.gmra.mxu0 %v1013
    %v1102 = vpop.f32.mrf.mxu0
    %v1103 = vadd.f32 0.0, %v1102
    %v1104 = vpop.f32.mrf.mxu0
    %1105 = vmatprep.mubr.f32.mxu0 0.0
    %1106 = vmatmul.mubr.f32.gmra.mxu0 %v1016
    %v1107 = vpop.f32.mrf.mxu0
    %v1108 = vadd.f32 0.0, %v1107
    %v1109 = vpop.f32.mrf.mxu0
    %1110 = vmatprep.mubr.f32.mxu0 0.0
    %1111 = vmatmul.mubr.f32.gmra.mxu0 %v1019
    %v1112 = vpop.f32.mrf.mxu0
    %v1113 = vadd.f32 0.0, %v1112
    %v1114 = vpop.f32.mrf.mxu0
    %1115 = vmatprep.mubr.f32.mxu0 0.0
    %1116 = vmatmul.mubr.f32.gmra.mxu0 %v1022
    %v1117 = vpop.f32.mrf.mxu0
    %v1118 = vadd.f32 0.0, %v1117
    %v1119 = vpop.f32.mrf.mxu0
    %1120 = vmatprep.mubr.f32.mxu0 0.0
    %1121 = vmatmul.mubr.f32.gmra.mxu0 %v1025
    %v1122 = vpop.f32.mrf.mxu0
    %v1123 = vadd.f32 0.0, %v1122
    %v1124 = vpop.f32.mrf.mxu0
    %1125 = vmatprep.mubr.f32.mxu0 0.0
    %1126 = vmatmul.mubr.f32.gmra.mxu0 %v1028
    %v1127 = vpop.f32.mrf.mxu0
    %v1128 = vadd.f32 0.0, %v1127
    %v1129 = vpop.f32.mrf.mxu0
    %1130 = vmatprep.mubr.f32.mxu0 0.0
    %1131 = vmatmul.mubr.f32.gmra.mxu0 %v1031
    %v1132 = vpop.f32.mrf.mxu0
    %v1133 = vadd.f32 0.0, %v1132
    %v1134 = vpop.f32.mrf.mxu0
    %1135 = vmatprep.mubr.f32.mxu0 0.0
    %1136 = vmatmul.mubr.f32.gmra.mxu0 %v1034
    %v1137 = vpop.f32.mrf.mxu0
    %v1138 = vadd.f32 0.0, %v1137
    %v1139 = vpop.f32.mrf.mxu0
    %1140 = vdwg.mxu0
    %v1141 = vadd.f32 %v958, %v1103
    %v1142 = vadd.f32 %v963, %v1108
    %v1143 = vadd.f32 %v968, %v1113
    %v1144 = vadd.f32 %v973, %v1118
    %v1145 = vadd.f32 %v978, %v1123
    %v1146 = vadd.f32 %v983, %v1128
    %v1147 = vadd.f32 %v988, %v1133
    %v1148 = vadd.f32 %v993, %v1138
    %vm1149 = vcmp.gt.f32.partialorder %v1141, 0.0
    %vm1150 = vcmp.gt.f32.partialorder %v1142, 0.0
    %vm1151 = vcmp.gt.f32.partialorder %v1143, 0.0
    %vm1152 = vcmp.gt.f32.partialorder %v1144, 0.0
    %vm1153 = vcmp.gt.f32.partialorder %v1145, 0.0
    %vm1154 = vcmp.gt.f32.partialorder %v1146, 0.0
    %vm1155 = vcmp.gt.f32.partialorder %v1147, 0.0
    %vm1156 = vcmp.gt.f32.partialorder %v1148, 0.0
    %v1157 = vmul.f32 %v1141, 0.01
    %v1158 = vmul.f32 %v1142, 0.01
    %v1159 = vmul.f32 %v1143, 0.01
    %v1160 = vmul.f32 %v1144, 0.01
    %v1161 = vmul.f32 %v1145, 0.01
    %v1162 = vmul.f32 %v1146, 0.01
    %v1163 = vmul.f32 %v1147, 0.01
    %v1164 = vmul.f32 %v1148, 0.01
    %v1165 = vsel %vm1149, %v1141, %v1157
    %v1166 = vsel %vm1150, %v1142, %v1158
    %v1167 = vsel %vm1151, %v1143, %v1159
    %v1168 = vsel %vm1152, %v1144, %v1160
    %v1169 = vsel %vm1153, %v1145, %v1161
    %v1170 = vsel %vm1154, %v1146, %v1162
    %v1171 = vsel %vm1155, %v1147, %v1163
    %v1172 = vsel %vm1156, %v1148, %v1164
    %vm1173 = vcmp.gt.f32.partialorder %v45, 0.0
    %vm1174 = vcmp.gt.f32.partialorder %v46, 0.0
    %vm1175 = vcmp.gt.f32.partialorder %v47, 0.0
    %vm1176 = vcmp.gt.f32.partialorder %v48, 0.0
    %vm1177 = vcmp.gt.f32.partialorder %v49, 0.0
    %vm1178 = vcmp.gt.f32.partialorder %v50, 0.0
    %vm1179 = vcmp.gt.f32.partialorder %v51, 0.0
    %vm1180 = vcmp.gt.f32.partialorder %v52, 0.0
    %1182 = vset.pattern.permute.xlu0 0
    %1183 = vperm.xlu0 %1182, %v1165
    %v1184 = vpop.permute.xlu0 %1183
    %1187 = vset.pattern.permute.xlu0 0
    %1188 = vperm.xlu0 %1187, %v1166
    %v1189 = vpop.permute.xlu0 %1188
    %1192 = vset.pattern.permute.xlu0 0
    %1193 = vperm.xlu0 %1192, %v1167
    %v1194 = vpop.permute.xlu0 %1193
    %1197 = vset.pattern.permute.xlu0 0
    %1198 = vperm.xlu0 %1197, %v1168
    %v1199 = vpop.permute.xlu0 %1198
    %1202 = vset.pattern.permute.xlu0 0
    %1203 = vperm.xlu0 %1202, %v1169
    %v1204 = vpop.permute.xlu0 %1203
    %1207 = vset.pattern.permute.xlu0 0
    %1208 = vperm.xlu0 %1207, %v1170
    %v1209 = vpop.permute.xlu0 %1208
    %1212 = vset.pattern.permute.xlu0 0
    %1213 = vperm.xlu0 %1212, %v1171
    %v1214 = vpop.permute.xlu0 %1213
    %1217 = vset.pattern.permute.xlu0 0
    %1218 = vperm.xlu0 %1217, %v1172
    %v1219 = vpop.permute.xlu0 %1218
    %v1221 = vsel %vm1173, %v1184, -1e+30
    %v1222 = vsel %vm1174, %v1189, -1e+30
    %v1223 = vsel %vm1175, %v1194, -1e+30
    %v1224 = vsel %vm1176, %v1199, -1e+30
    %v1225 = vsel %vm1177, %v1204, -1e+30
    %v1226 = vsel %vm1178, %v1209, -1e+30
    %v1227 = vsel %vm1179, %v1214, -1e+30
    %v1228 = vsel %vm1180, %v1219, -1e+30
    %v1229 = vsel %vm160, %v1221, -inf
    %v1230 = vsel %vm160, %v1222, -inf
    %v1231 = vsel %vm160, %v1223, -inf
    %v1232 = vsel %vm160, %v1224, -inf
    %v1233 = vsel %vm160, %v1225, -inf
    %v1234 = vmax.f32 %v1229, %v1233
    %v1235 = vsel %vm160, %v1226, -inf
    %v1236 = vmax.f32 %v1230, %v1235
    %v1237 = vsel %vm160, %v1227, -inf
    %v1238 = vmax.f32 %v1231, %v1237
    %v1239 = vsel %vm160, %v1228, -inf
    %v1240 = vmax.f32 %v1232, %v1239
    %v1241 = vmax.f32 %v1234, %v1236
    %v1242 = vmax.f32 %v1238, %v1240
    %v1243 = vmax.f32 %v1241, %v1242
    %v1244 = vrot.slane %v1243, 4
    %v1245 = vmax.f32 %v1243, %v1244
    %v1246 = vrot.slane %v1245, 2
    %v1247 = vmax.f32 %v1245, %v1246
    %v1248 = vrot.slane %v1247, 1
    %v1249 = vmax.f32 %v1247, %v1248
    %v1250 = vmul.f32 %v45, %v1249
    %v1251 = vmul.f32 %v46, %v1249
    %v1252 = vmul.f32 %v47, %v1249
    %v1253 = vmul.f32 %v48, %v1249
    %v1254 = vmul.f32 %v49, %v1249
    %v1255 = vmul.f32 %v50, %v1249
    %v1256 = vmul.f32 %v51, %v1249
    %v1257 = vmul.f32 %v52, %v1249
    %v1258 = vsel %vm160, %v1250, 0.0
    %1259 = vadd.xlane.f32.xlu0 %v1258
    %v1260 = vpop.xlane.xlu0 %1259
    %v1261 = vsel %vm160, %v1251, 0.0
    %1262 = vadd.xlane.f32.xlu0 %v1261
    %v1263 = vpop.xlane.xlu0 %1262
    %v1264 = vsel %vm160, %v1252, 0.0
    %1265 = vadd.xlane.f32.xlu0 %v1264
    %v1266 = vpop.xlane.xlu0 %1265
    %v1267 = vsel %vm160, %v1253, 0.0
    %1268 = vadd.xlane.f32.xlu0 %v1267
    %v1269 = vpop.xlane.xlu0 %1268
    %v1270 = vsel %vm160, %v1254, 0.0
    %1271 = vadd.xlane.f32.xlu0 %v1270
    %v1272 = vpop.xlane.xlu0 %1271
    %v1273 = vsel %vm160, %v1255, 0.0
    %1274 = vadd.xlane.f32.xlu0 %v1273
    %v1275 = vpop.xlane.xlu0 %1274
    %v1276 = vsel %vm160, %v1256, 0.0
    %1277 = vadd.xlane.f32.xlu0 %v1276
    %v1278 = vpop.xlane.xlu0 %1277
    %v1279 = vsel %vm160, %v1257, 0.0
    %1280 = vadd.xlane.f32.xlu0 %v1279
    %v1281 = vpop.xlane.xlu0 %1280
    %v1282 = vsub.f32 %v1165, %v1260
    %v1283 = vsub.f32 %v1166, %v1263
    %v1284 = vsub.f32 %v1167, %v1266
    %v1285 = vsub.f32 %v1168, %v1269
    %v1286 = vsub.f32 %v1169, %v1272
    %v1287 = vsub.f32 %v1170, %v1275
    %v1288 = vsub.f32 %v1171, %v1278
    %v1289 = vsub.f32 %v1172, %v1281
    %v1290 = vmul.f32 %v1282, 1.442695
    %v1291 = vpow.pop %v1290
    %v1292 = vmul.f32 %v1283, 1.442695
    %v1293 = vpow.pop %v1292
    %v1294 = vmul.f32 %v1284, 1.442695
    %v1295 = vpow.pop %v1294
    %v1296 = vmul.f32 %v1285, 1.442695
    %v1297 = vpow.pop %v1296
    %v1298 = vmul.f32 %v1286, 1.442695
    %v1299 = vpow.pop %v1298
    %v1300 = vmul.f32 %v1287, 1.442695
    %v1301 = vpow.pop %v1300
    %v1302 = vmul.f32 %v1288, 1.442695
    %v1303 = vpow.pop %v1302
    %v1304 = vmul.f32 %v1289, 1.442695
    %v1305 = vpow.pop %v1304
    %1307 = vset.pattern.permute.xlu0 0
    %1308 = vperm.xlu0 %1307, %v1291
    %v1309 = vpop.permute.xlu0 %1308
    %1312 = vset.pattern.permute.xlu0 0
    %1313 = vperm.xlu0 %1312, %v1293
    %v1314 = vpop.permute.xlu0 %1313
    %1317 = vset.pattern.permute.xlu0 0
    %1318 = vperm.xlu0 %1317, %v1295
    %v1319 = vpop.permute.xlu0 %1318
    %1322 = vset.pattern.permute.xlu0 0
    %1323 = vperm.xlu0 %1322, %v1297
    %v1324 = vpop.permute.xlu0 %1323
    %1327 = vset.pattern.permute.xlu0 0
    %1328 = vperm.xlu0 %1327, %v1299
    %v1329 = vpop.permute.xlu0 %1328
    %1332 = vset.pattern.permute.xlu0 0
    %1333 = vperm.xlu0 %1332, %v1301
    %v1334 = vpop.permute.xlu0 %1333
    %1337 = vset.pattern.permute.xlu0 0
    %1338 = vperm.xlu0 %1337, %v1303
    %v1339 = vpop.permute.xlu0 %1338
    %1342 = vset.pattern.permute.xlu0 0
    %1343 = vperm.xlu0 %1342, %v1305
    %v1344 = vpop.permute.xlu0 %1343
    %v1346 = vmul.f32 %v45, %v1309
    %v1347 = vmul.f32 %v46, %v1314
    %v1348 = vmul.f32 %v47, %v1319
    %v1349 = vmul.f32 %v48, %v1324
    %v1350 = vmul.f32 %v49, %v1329
    %v1351 = vmul.f32 %v50, %v1334
    %v1352 = vmul.f32 %v51, %v1339
    %v1353 = vmul.f32 %v52, %v1344
    %v1354 = vsel %vm160, %v1346, 0.0
    %v1355 = vsel %vm160, %v1347, 0.0
    %v1356 = vadd.f32 %v1354, %v1355
    %v1357 = vsel %vm160, %v1348, 0.0
    %v1358 = vadd.f32 %v1356, %v1357
    %v1359 = vsel %vm160, %v1349, 0.0
    %v1360 = vadd.f32 %v1358, %v1359
    %v1361 = vsel %vm160, %v1350, 0.0
    %v1362 = vadd.f32 %v1360, %v1361
    %v1363 = vsel %vm160, %v1351, 0.0
    %v1364 = vadd.f32 %v1362, %v1363
    %v1365 = vsel %vm160, %v1352, 0.0
    %v1366 = vadd.f32 %v1364, %v1365
    %v1367 = vsel %vm160, %v1353, 0.0
    %v1368 = vadd.f32 %v1366, %v1367
    %v1369 = vrot.slane %v1368, 4
    %v1370 = vadd.f32 %v1368, %v1369
    %v1371 = vrot.slane %v1370, 2
    %v1372 = vadd.f32 %v1370, %v1371
    %v1373 = vrot.slane %v1372, 1
    %v1374 = vadd.f32 %v1372, %v1373
    %v1375 = vmul.f32 %v45, %v1374
    %v1376 = vmul.f32 %v46, %v1374
    %v1377 = vmul.f32 %v47, %v1374
    %v1378 = vmul.f32 %v48, %v1374
    %v1379 = vmul.f32 %v49, %v1374
    %v1380 = vmul.f32 %v50, %v1374
    %v1381 = vmul.f32 %v51, %v1374
    %v1382 = vmul.f32 %v52, %v1374
    %v1383 = vsel %vm160, %v1375, 0.0
    %1384 = vadd.xlane.f32.xlu0 %v1383
    %v1385 = vpop.xlane.xlu0 %1384
    %v1386 = vsel %vm160, %v1376, 0.0
    %1387 = vadd.xlane.f32.xlu0 %v1386
    %v1388 = vpop.xlane.xlu0 %1387
    %v1389 = vsel %vm160, %v1377, 0.0
    %1390 = vadd.xlane.f32.xlu0 %v1389
    %v1391 = vpop.xlane.xlu0 %1390
    %v1392 = vsel %vm160, %v1378, 0.0
    %1393 = vadd.xlane.f32.xlu0 %v1392
    %v1394 = vpop.xlane.xlu0 %1393
    %v1395 = vsel %vm160, %v1379, 0.0
    %1396 = vadd.xlane.f32.xlu0 %v1395
    %v1397 = vpop.xlane.xlu0 %1396
    %v1398 = vsel %vm160, %v1380, 0.0
    %1399 = vadd.xlane.f32.xlu0 %v1398
    %v1400 = vpop.xlane.xlu0 %1399
    %v1401 = vsel %vm160, %v1381, 0.0
    %1402 = vadd.xlane.f32.xlu0 %v1401
    %v1403 = vpop.xlane.xlu0 %1402
    %v1404 = vsel %vm160, %v1382, 0.0
    %1405 = vadd.xlane.f32.xlu0 %v1404
    %v1406 = vpop.xlane.xlu0 %1405
    %v1407 = vadd.f32 %v1385, 1e-16
    %v1408 = vadd.f32 %v1388, 1e-16
    %v1409 = vadd.f32 %v1391, 1e-16
    %v1410 = vadd.f32 %v1394, 1e-16
    %v1411 = vadd.f32 %v1397, 1e-16
    %v1412 = vadd.f32 %v1400, 1e-16
    %v1413 = vadd.f32 %v1403, 1e-16
    %v1414 = vadd.f32 %v1406, 1e-16
    %v1415 = vrcp.pop %v1407
    %v1416 = vrcp.pop %v1408
    %v1417 = vrcp.pop %v1409
    %v1418 = vrcp.pop %v1410
    %v1419 = vrcp.pop %v1411
    %v1420 = vrcp.pop %v1412
    %v1421 = vrcp.pop %v1413
    %v1422 = vrcp.pop %v1414
    %v1423 = vmul.f32 %v1291, %v1415
    %v1424 = vmul.f32 %v1293, %v1416
    %v1425 = vmul.f32 %v1295, %v1417
    %v1426 = vmul.f32 %v1297, %v1418
    %v1427 = vmul.f32 %v1299, %v1419
    %v1428 = vmul.f32 %v1301, %v1420
    %v1429 = vmul.f32 %v1303, %v1421
    %v1430 = vmul.f32 %v1305, %v1422
    %v1431 = vmul.f32 %v1423, 0.9
    %v1432 = vmul.f32 %v1424, 0.9
    %v1433 = vmul.f32 %v1425, 0.9
    %v1434 = vmul.f32 %v1426, 0.9
    %v1435 = vmul.f32 %v1427, 0.9
    %v1436 = vmul.f32 %v1428, 0.9
    %v1437 = vmul.f32 %v1429, 0.9
    %v1438 = vmul.f32 %v1430, 0.9
    %1440 = vset.pattern.permute.xlu0 0
    %1441 = vperm.xlu0 %1440, %v1431
    %v1442 = vpop.permute.xlu0 %1441
    %1445 = vset.pattern.permute.xlu0 0
    %1446 = vperm.xlu0 %1445, %v1432
    %v1447 = vpop.permute.xlu0 %1446
    %1450 = vset.pattern.permute.xlu0 0
    %1451 = vperm.xlu0 %1450, %v1433
    %v1452 = vpop.permute.xlu0 %1451
    %1455 = vset.pattern.permute.xlu0 0
    %1456 = vperm.xlu0 %1455, %v1434
    %v1457 = vpop.permute.xlu0 %1456
    %1460 = vset.pattern.permute.xlu0 0
    %1461 = vperm.xlu0 %1460, %v1435
    %v1462 = vpop.permute.xlu0 %1461
    %1465 = vset.pattern.permute.xlu0 0
    %1466 = vperm.xlu0 %1465, %v1436
    %v1467 = vpop.permute.xlu0 %1466
    %1470 = vset.pattern.permute.xlu0 0
    %1471 = vperm.xlu0 %1470, %v1437
    %v1472 = vpop.permute.xlu0 %1471
    %1475 = vset.pattern.permute.xlu0 0
    %1476 = vperm.xlu0 %1475, %v1438
    %v1477 = vpop.permute.xlu0 %1476
    %v1479 = vmul.f32 %v1442, %v55
    %v1480 = vmul.f32 %v1447, %v56
    %v1481 = vmul.f32 %v1452, %v57
    %v1482 = vmul.f32 %v1457, %v58
    %v1483 = vmul.f32 %v1462, %v59
    %v1484 = vmul.f32 %v1467, %v60
    %v1485 = vmul.f32 %v1472, %v61
    %v1486 = vmul.f32 %v1477, %v62
    %v1488 = vsel %vm737, %v53, 0
    %v1491 = vsel %vm737, %v54, 0
    %1493 = vmatprep.subr.mxu0 0.0
    %1494 = vmatpush1.msra.mxu0 0.0
    %1495 = vmatprep.subr.mxu0 0.0
    %1496 = vmatpush1.msra.mxu0 0.0
    %1497 = vmatprep.subr.mxu0 0.0
    %1498 = vmatpush1.msra.mxu0 0.0
    %1499 = vmatprep.subr.mxu0 0.0
    %1500 = vmatpush1.msra.mxu0 0.0
    %1501 = vmatprep.subr.mxu0 0.0
    %1502 = vmatpush1.msra.mxu0 0.0
    %1503 = vmatprep.subr.mxu0 0.0
    %1504 = vmatpush1.msra.mxu0 0.0
    %1505 = vmatprep.subr.mxu0 0.0
    %1506 = vmatpush1.msra.mxu0 0.0
    %1507 = vmatprep.subr.mxu0 0.0
    %1508 = vmatpush1.msra.mxu0 0.0
    %1509 = vmatprep.subr.mxu0 0.0
    %1510 = vmatpush1.msra.mxu0 %v1486
    %1511 = vmatprep.subr.mxu0 0.0
    %1512 = vmatpush1.msra.mxu0 %v1485
    %1513 = vmatprep.subr.mxu0 0.0
    %1514 = vmatpush1.msra.mxu0 %v1484
    %1515 = vmatprep.subr.mxu0 0.0
    %1516 = vmatpush1.msra.mxu0 %v1483
    %1517 = vmatprep.subr.mxu0 0.0
    %1518 = vmatpush1.msra.mxu0 %v1482
    %1519 = vmatprep.subr.mxu0 0.0
    %1520 = vmatpush1.msra.mxu0 %v1481
    %1521 = vmatprep.subr.mxu0 0.0
    %1522 = vmatpush1.msra.mxu0 %v1480
    %1523 = vmatprep.subr.mxu0 0.0
    %1524 = vmatpush1.msra.mxu0 %v1479
    %1525 = vmatprep.subr.mxu0 0.0
    %1526 = vmatpush2.msra.mxu0 0.0
    %1527 = vmatprep.subr.mxu0 0.0
    %1528 = vmatpush2.msra.mxu0 0.0
    %1529 = vmatprep.subr.mxu0 0.0
    %1530 = vmatpush2.msra.mxu0 0.0
    %1531 = vmatprep.subr.mxu0 0.0
    %1532 = vmatpush2.msra.mxu0 0.0
    %1533 = vmatprep.subr.mxu0 0.0
    %1534 = vmatpush2.msra.mxu0 0.0
    %1535 = vmatprep.subr.mxu0 0.0
    %1536 = vmatpush2.msra.mxu0 0.0
    %1537 = vmatprep.subr.mxu0 0.0
    %1538 = vmatpush2.msra.mxu0 0.0
    %1539 = vmatprep.subr.mxu0 0.0
    %1540 = vmatpush2.msra.mxu0 0.0
    %1541 = vmatprep.subr.mxu0 0.0
    %1542 = vmatpush2.msra.mxu0 0.0
    %1543 = vmatprep.subr.mxu0 0.0
    %1544 = vmatpush2.msra.mxu0 0.0
    %1545 = vmatprep.subr.mxu0 0.0
    %1546 = vmatpush2.msra.mxu0 0.0
    %1547 = vmatprep.subr.mxu0 0.0
    %1548 = vmatpush2.msra.mxu0 0.0
    %1549 = vmatprep.subr.mxu0 0.0
    %1550 = vmatpush2.msra.mxu0 0.0
    %1551 = vmatprep.subr.mxu0 0.0
    %1552 = vmatpush2.msra.mxu0 0.0
    %1553 = vmatprep.subr.mxu0 0.0
    %1554 = vmatpush2.msra.mxu0 0.0
    %1555 = vmatprep.subr.mxu0 0.0
    %1556 = vmatpush2.msra.mxu0 0.0
    %1557 = vmatprep.mubr.f32.mxu0 0.0
    %1558 = vmatmul.mubr.f32.gmra.mxu0 %v1488
    %v1559 = vpop.f32.mrf.mxu0
    %v1560 = vadd.f32 0.0, %v1559
    %v1561 = vpop.f32.mrf.mxu0
    %1562 = vmatprep.mubr.f32.mxu0 0.0
    %1563 = vmatmul.mubr.f32.gmra.mxu0 %v1491
    %v1564 = vpop.f32.mrf.mxu0
    %v1565 = vadd.f32 0.0, %v1564
    %v1566 = vpop.f32.mrf.mxu0
    %1567 = vdwg.mxu0
    %v1568 = vmul.f32 %v71, 0.1
    %v1569 = vmul.f32 %v72, 0.1
    %v1571 = vsel %vm160, %v1560, 0
    %v1574 = vsel %vm160, %v1565, 0
    %1576 = vmatprep.subr.mxu0 0.0
    %1577 = vmatpush1.msra.mxu0 0.0
    %1578 = vmatprep.subr.mxu0 0.0
    %1579 = vmatpush1.msra.mxu0 0.0
    %1580 = vmatprep.subr.mxu0 0.0
    %1581 = vmatpush1.msra.mxu0 0.0
    %1582 = vmatprep.subr.mxu0 0.0
    %1583 = vmatpush1.msra.mxu0 0.0
    %1584 = vmatprep.subr.mxu0 0.0
    %1585 = vmatpush1.msra.mxu0 0.0
    %1586 = vmatprep.subr.mxu0 0.0
    %1587 = vmatpush1.msra.mxu0 0.0
    %1588 = vmatprep.subr.mxu0 0.0
    %1589 = vmatpush1.msra.mxu0 0.0
    %1590 = vmatprep.subr.mxu0 0.0
    %1591 = vmatpush1.msra.mxu0 0.0
    %1592 = vmatprep.subr.mxu0 0.0
    %1593 = vmatpush1.msra.mxu0 0.0
    %1594 = vmatprep.subr.mxu0 0.0
    %1595 = vmatpush1.msra.mxu0 0.0
    %1596 = vmatprep.subr.mxu0 0.0
    %1597 = vmatpush1.msra.mxu0 0.0
    %1598 = vmatprep.subr.mxu0 0.0
    %1599 = vmatpush1.msra.mxu0 0.0
    %1600 = vmatprep.subr.mxu0 0.0
    %1601 = vmatpush1.msra.mxu0 0.0
    %1602 = vmatprep.subr.mxu0 0.0
    %1603 = vmatpush1.msra.mxu0 0.0
    %1604 = vmatprep.subr.mxu0 0.0
    %1605 = vmatpush1.msra.mxu0 %v72
    %1606 = vmatprep.subr.mxu0 0.0
    %1607 = vmatpush1.msra.mxu0 %v71
    %1608 = vmatprep.subr.mxu0 0.0
    %1609 = vmatpush2.msra.mxu0 0.0
    %1610 = vmatprep.subr.mxu0 0.0
    %1611 = vmatpush2.msra.mxu0 0.0
    %1612 = vmatprep.subr.mxu0 0.0
    %1613 = vmatpush2.msra.mxu0 0.0
    %1614 = vmatprep.subr.mxu0 0.0
    %1615 = vmatpush2.msra.mxu0 0.0
    %1616 = vmatprep.subr.mxu0 0.0
    %1617 = vmatpush2.msra.mxu0 0.0
    %1618 = vmatprep.subr.mxu0 0.0
    %1619 = vmatpush2.msra.mxu0 0.0
    %1620 = vmatprep.subr.mxu0 0.0
    %1621 = vmatpush2.msra.mxu0 0.0
    %1622 = vmatprep.subr.mxu0 0.0
    %1623 = vmatpush2.msra.mxu0 0.0
    %1624 = vmatprep.subr.mxu0 0.0
    %1625 = vmatpush2.msra.mxu0 0.0
    %1626 = vmatprep.subr.mxu0 0.0
    %1627 = vmatpush2.msra.mxu0 0.0
    %1628 = vmatprep.subr.mxu0 0.0
    %1629 = vmatpush2.msra.mxu0 0.0
    %1630 = vmatprep.subr.mxu0 0.0
    %1631 = vmatpush2.msra.mxu0 0.0
    %1632 = vmatprep.subr.mxu0 0.0
    %1633 = vmatpush2.msra.mxu0 0.0
    %1634 = vmatprep.subr.mxu0 0.0
    %1635 = vmatpush2.msra.mxu0 0.0
    %1636 = vmatprep.subr.mxu0 0.0
    %1637 = vmatpush2.msra.mxu0 0.0
    %1638 = vmatprep.subr.mxu0 0.0
    %1639 = vmatpush2.msra.mxu0 0.0
    %1640 = vmatprep.mubr.f32.mxu0 0.0
    %1641 = vmatmul.mubr.f32.gmra.mxu0 %v1571
    %v1642 = vpop.f32.mrf.mxu0
    %v1643 = vadd.f32 %v1568, %v1642
    %v1644 = vpop.f32.mrf.mxu0
    %1645 = vmatprep.mubr.f32.mxu0 0.0
    %1646 = vmatmul.mubr.f32.gmra.mxu0 %v1574
    %v1647 = vpop.f32.mrf.mxu0
    %v1648 = vadd.f32 %v1569, %v1647
    %v1649 = vpop.f32.mrf.mxu0
    %1650 = vdwg.mxu0
    %1651 = vmatprep.subr.mxu0 0.0
    %1652 = vmatpush1.msra.mxu0 0.0
    %1653 = vmatprep.subr.mxu0 0.0
    %1654 = vmatpush1.msra.mxu0 0.0
    %1655 = vmatprep.subr.mxu0 0.0
    %1656 = vmatpush1.msra.mxu0 0.0
    %1657 = vmatprep.subr.mxu0 0.0
    %1658 = vmatpush1.msra.mxu0 0.0
    %1659 = vmatprep.subr.mxu0 0.0
    %1660 = vmatpush1.msra.mxu0 0.0
    %1661 = vmatprep.subr.mxu0 0.0
    %1662 = vmatpush1.msra.mxu0 0.0
    %1663 = vmatprep.subr.mxu0 0.0
    %1664 = vmatpush1.msra.mxu0 0.0
    %1665 = vmatprep.subr.mxu0 0.0
    %1666 = vmatpush1.msra.mxu0 0.0
    %1667 = vmatprep.subr.mxu0 0.0
    %1668 = vmatpush1.msra.mxu0 0.0
    %1669 = vmatprep.subr.mxu0 0.0
    %1670 = vmatpush1.msra.mxu0 0.0
    %1671 = vmatprep.subr.mxu0 0.0
    %1672 = vmatpush1.msra.mxu0 0.0
    %1673 = vmatprep.subr.mxu0 0.0
    %1674 = vmatpush1.msra.mxu0 0.0
    %1675 = vmatprep.subr.mxu0 0.0
    %1676 = vmatpush1.msra.mxu0 0.0
    %1677 = vmatprep.subr.mxu0 0.0
    %1678 = vmatpush1.msra.mxu0 0.0
    %1679 = vmatprep.subr.mxu0 0.0
    %1680 = vmatpush1.msra.mxu0 %v1648
    %1681 = vmatprep.subr.mxu0 0.0
    %1682 = vmatpush1.msra.mxu0 %v1643
    %1683 = vmatprep.subr.mxu0 0.0
    %1684 = vmatpush2.msra.mxu0 0.0
    %1685 = vmatprep.subr.mxu0 0.0
    %1686 = vmatpush2.msra.mxu0 0.0
    %1687 = vmatprep.subr.mxu0 0.0
    %1688 = vmatpush2.msra.mxu0 0.0
    %1689 = vmatprep.subr.mxu0 0.0
    %1690 = vmatpush2.msra.mxu0 0.0
    %1691 = vmatprep.subr.mxu0 0.0
    %1692 = vmatpush2.msra.mxu0 0.0
    %1693 = vmatprep.subr.mxu0 0.0
    %1694 = vmatpush2.msra.mxu0 0.0
    %1695 = vmatprep.subr.mxu0 0.0
    %1696 = vmatpush2.msra.mxu0 0.0
    %1697 = vmatprep.subr.mxu0 0.0
    %1698 = vmatpush2.msra.mxu0 0.0
    %1699 = vmatprep.subr.mxu0 0.0
    %1700 = vmatpush2.msra.mxu0 0.0
    %1701 = vmatprep.subr.mxu0 0.0
    %1702 = vmatpush2.msra.mxu0 0.0
    %1703 = vmatprep.subr.mxu0 0.0
    %1704 = vmatpush2.msra.mxu0 0.0
    %1705 = vmatprep.subr.mxu0 0.0
    %1706 = vmatpush2.msra.mxu0 0.0
    %1707 = vmatprep.subr.mxu0 0.0
    %1708 = vmatpush2.msra.mxu0 0.0
    %1709 = vmatprep.subr.mxu0 0.0
    %1710 = vmatpush2.msra.mxu0 0.0
    %1711 = vmatprep.subr.mxu0 0.0
    %1712 = vmatpush2.msra.mxu0 0.0
    %1713 = vmatprep.subr.mxu0 0.0
    %1714 = vmatpush2.msra.mxu0 0.0
    %1715 = vmatprep.mubr.f32.mxu0 0.0
    %1716 = vmatmul.mubr.f32.gmra.mxu0 %v1571
    %v1717 = vpop.f32.mrf.mxu0
    %v1718 = vadd.f32 %v1568, %v1717
    %v1719 = vpop.f32.mrf.mxu0
    %1720 = vmatprep.mubr.f32.mxu0 0.0
    %1721 = vmatmul.mubr.f32.gmra.mxu0 %v1574
    %v1722 = vpop.f32.mrf.mxu0
    %v1723 = vadd.f32 %v1569, %v1722
    %v1724 = vpop.f32.mrf.mxu0
    %1725 = vdwg.mxu0
    %1726 = vmatprep.subr.mxu0 0.0
    %1727 = vmatpush1.msra.mxu0 0.0
    %1728 = vmatprep.subr.mxu0 0.0
    %1729 = vmatpush1.msra.mxu0 0.0
    %1730 = vmatprep.subr.mxu0 0.0
    %1731 = vmatpush1.msra.mxu0 0.0
    %1732 = vmatprep.subr.mxu0 0.0
    %1733 = vmatpush1.msra.mxu0 0.0
    %1734 = vmatprep.subr.mxu0 0.0
    %1735 = vmatpush1.msra.mxu0 0.0
    %1736 = vmatprep.subr.mxu0 0.0
    %1737 = vmatpush1.msra.mxu0 0.0
    %1738 = vmatprep.subr.mxu0 0.0
    %1739 = vmatpush1.msra.mxu0 0.0
    %1740 = vmatprep.subr.mxu0 0.0
    %1741 = vmatpush1.msra.mxu0 0.0
    %1742 = vmatprep.subr.mxu0 0.0
    %1743 = vmatpush1.msra.mxu0 0.0
    %1744 = vmatprep.subr.mxu0 0.0
    %1745 = vmatpush1.msra.mxu0 0.0
    %1746 = vmatprep.subr.mxu0 0.0
    %1747 = vmatpush1.msra.mxu0 0.0
    %1748 = vmatprep.subr.mxu0 0.0
    %1749 = vmatpush1.msra.mxu0 0.0
    %1750 = vmatprep.subr.mxu0 0.0
    %1751 = vmatpush1.msra.mxu0 0.0
    %1752 = vmatprep.subr.mxu0 0.0
    %1753 = vmatpush1.msra.mxu0 0.0
    %1754 = vmatprep.subr.mxu0 0.0
    %1755 = vmatpush1.msra.mxu0 %v1723
    %1756 = vmatprep.subr.mxu0 0.0
    %1757 = vmatpush1.msra.mxu0 %v1718
    %1758 = vmatprep.subr.mxu0 0.0
    %1759 = vmatpush2.msra.mxu0 0.0
    %1760 = vmatprep.subr.mxu0 0.0
    %1761 = vmatpush2.msra.mxu0 0.0
    %1762 = vmatprep.subr.mxu0 0.0
    %1763 = vmatpush2.msra.mxu0 0.0
    %1764 = vmatprep.subr.mxu0 0.0
    %1765 = vmatpush2.msra.mxu0 0.0
    %1766 = vmatprep.subr.mxu0 0.0
    %1767 = vmatpush2.msra.mxu0 0.0
    %1768 = vmatprep.subr.mxu0 0.0
    %1769 = vmatpush2.msra.mxu0 0.0
    %1770 = vmatprep.subr.mxu0 0.0
    %1771 = vmatpush2.msra.mxu0 0.0
    %1772 = vmatprep.subr.mxu0 0.0
    %1773 = vmatpush2.msra.mxu0 0.0
    %1774 = vmatprep.subr.mxu0 0.0
    %1775 = vmatpush2.msra.mxu0 0.0
    %1776 = vmatprep.subr.mxu0 0.0
    %1777 = vmatpush2.msra.mxu0 0.0
    %1778 = vmatprep.subr.mxu0 0.0
    %1779 = vmatpush2.msra.mxu0 0.0
    %1780 = vmatprep.subr.mxu0 0.0
    %1781 = vmatpush2.msra.mxu0 0.0
    %1782 = vmatprep.subr.mxu0 0.0
    %1783 = vmatpush2.msra.mxu0 0.0
    %1784 = vmatprep.subr.mxu0 0.0
    %1785 = vmatpush2.msra.mxu0 0.0
    %1786 = vmatprep.subr.mxu0 0.0
    %1787 = vmatpush2.msra.mxu0 0.0
    %1788 = vmatprep.subr.mxu0 0.0
    %1789 = vmatpush2.msra.mxu0 0.0
    %1790 = vmatprep.mubr.f32.mxu0 0.0
    %1791 = vmatmul.mubr.f32.gmra.mxu0 %v1571
    %v1792 = vpop.f32.mrf.mxu0
    %v1793 = vadd.f32 %v1568, %v1792
    %v1794 = vpop.f32.mrf.mxu0
    %1795 = vmatprep.mubr.f32.mxu0 0.0
    %1796 = vmatmul.mubr.f32.gmra.mxu0 %v1574
    %v1797 = vpop.f32.mrf.mxu0
    %v1798 = vadd.f32 %v1569, %v1797
    %v1799 = vpop.f32.mrf.mxu0
    %1800 = vdwg.mxu0
    %v1801 = vld [vmem:[%s12] sm:$0xff]
    %v1802 = vld [vmem:[%s12 + $0x8] sm:$0xff]
    %v1803 = vld [vmem:[%s12 + $0x10] sm:$0xff]
    %v1804 = vld [vmem:[%s12 + $0x18] sm:$0xff]
    %1805 = vset.pattern.permute.xlu0 1
    %1806 = vperm.xlu0 %1805, %v1165
    %v1807 = vpop.permute.xlu0 %1806
    %1809 = vset.pattern.permute.xlu0 1
    %1810 = vperm.xlu0 %1809, %v1166
    %v1811 = vpop.permute.xlu0 %1810
    %1813 = vset.pattern.permute.xlu0 1
    %1814 = vperm.xlu0 %1813, %v1167
    %v1815 = vpop.permute.xlu0 %1814
    %1817 = vset.pattern.permute.xlu0 1
    %1818 = vperm.xlu0 %1817, %v1168
    %v1819 = vpop.permute.xlu0 %1818
    %1821 = vset.pattern.permute.xlu0 1
    %1822 = vperm.xlu0 %1821, %v1169
    %v1823 = vpop.permute.xlu0 %1822
    %1825 = vset.pattern.permute.xlu0 1
    %1826 = vperm.xlu0 %1825, %v1170
    %v1827 = vpop.permute.xlu0 %1826
    %1829 = vset.pattern.permute.xlu0 1
    %1830 = vperm.xlu0 %1829, %v1171
    %v1831 = vpop.permute.xlu0 %1830
    %1833 = vset.pattern.permute.xlu0 1
    %1834 = vperm.xlu0 %1833, %v1172
    %v1835 = vpop.permute.xlu0 %1834
    %v1837 = vsel %vm1173, %v1807, -1e+30
    %v1838 = vsel %vm1174, %v1811, -1e+30
    %v1839 = vsel %vm1175, %v1815, -1e+30
    %v1840 = vsel %vm1176, %v1819, -1e+30
    %v1841 = vsel %vm1177, %v1823, -1e+30
    %v1842 = vsel %vm1178, %v1827, -1e+30
    %v1843 = vsel %vm1179, %v1831, -1e+30
    %v1844 = vsel %vm1180, %v1835, -1e+30
    %v1845 = vsel %vm160, %v1837, -inf
    %v1846 = vsel %vm160, %v1838, -inf
    %v1847 = vsel %vm160, %v1839, -inf
    %v1848 = vsel %vm160, %v1840, -inf
    %v1849 = vsel %vm160, %v1841, -inf
    %v1850 = vmax.f32 %v1845, %v1849
    %v1851 = vsel %vm160, %v1842, -inf
    %v1852 = vmax.f32 %v1846, %v1851
    %v1853 = vsel %vm160, %v1843, -inf
    %v1854 = vmax.f32 %v1847, %v1853
    %v1855 = vsel %vm160, %v1844, -inf
    %v1856 = vmax.f32 %v1848, %v1855
    %v1857 = vmax.f32 %v1850, %v1852
    %v1858 = vmax.f32 %v1854, %v1856
    %v1859 = vmax.f32 %v1857, %v1858
    %v1860 = vrot.slane %v1859, 4
    %v1861 = vmax.f32 %v1859, %v1860
    %v1862 = vrot.slane %v1861, 2
    %v1863 = vmax.f32 %v1861, %v1862
    %v1864 = vrot.slane %v1863, 1
    %v1865 = vmax.f32 %v1863, %v1864
    %v1866 = vmul.f32 %v45, %v1865
    %v1867 = vmul.f32 %v46, %v1865
    %v1868 = vmul.f32 %v47, %v1865
    %v1869 = vmul.f32 %v48, %v1865
    %v1870 = vmul.f32 %v49, %v1865
    %v1871 = vmul.f32 %v50, %v1865
    %v1872 = vmul.f32 %v51, %v1865
    %v1873 = vmul.f32 %v52, %v1865
    %v1874 = vsel %vm160, %v1866, 0.0
    %1875 = vadd.xlane.f32.xlu0 %v1874
    %v1876 = vpop.xlane.xlu0 %1875
    %v1877 = vsel %vm160, %v1867, 0.0
    %1878 = vadd.xlane.f32.xlu0 %v1877
    %v1879 = vpop.xlane.xlu0 %1878
    %v1880 = vsel %vm160, %v1868, 0.0
    %1881 = vadd.xlane.f32.xlu0 %v1880
    %v1882 = vpop.xlane.xlu0 %1881
    %v1883 = vsel %vm160, %v1869, 0.0
    %1884 = vadd.xlane.f32.xlu0 %v1883
    %v1885 = vpop.xlane.xlu0 %1884
    %v1886 = vsel %vm160, %v1870, 0.0
    %1887 = vadd.xlane.f32.xlu0 %v1886
    %v1888 = vpop.xlane.xlu0 %1887
    %v1889 = vsel %vm160, %v1871, 0.0
    %1890 = vadd.xlane.f32.xlu0 %v1889
    %v1891 = vpop.xlane.xlu0 %1890
    %v1892 = vsel %vm160, %v1872, 0.0
    %1893 = vadd.xlane.f32.xlu0 %v1892
    %v1894 = vpop.xlane.xlu0 %1893
    %v1895 = vsel %vm160, %v1873, 0.0
    %1896 = vadd.xlane.f32.xlu0 %v1895
    %v1897 = vpop.xlane.xlu0 %1896
    %v1898 = vsub.f32 %v1165, %v1876
    %v1899 = vsub.f32 %v1166, %v1879
    %v1900 = vsub.f32 %v1167, %v1882
    %v1901 = vsub.f32 %v1168, %v1885
    %v1902 = vsub.f32 %v1169, %v1888
    %v1903 = vsub.f32 %v1170, %v1891
    %v1904 = vsub.f32 %v1171, %v1894
    %v1905 = vsub.f32 %v1172, %v1897
    %v1906 = vmul.f32 %v1898, 1.442695
    %v1907 = vpow.pop %v1906
    %v1908 = vmul.f32 %v1899, 1.442695
    %v1909 = vpow.pop %v1908
    %v1910 = vmul.f32 %v1900, 1.442695
    %v1911 = vpow.pop %v1910
    %v1912 = vmul.f32 %v1901, 1.442695
    %v1913 = vpow.pop %v1912
    %v1914 = vmul.f32 %v1902, 1.442695
    %v1915 = vpow.pop %v1914
    %v1916 = vmul.f32 %v1903, 1.442695
    %v1917 = vpow.pop %v1916
    %v1918 = vmul.f32 %v1904, 1.442695
    %v1919 = vpow.pop %v1918
    %v1920 = vmul.f32 %v1905, 1.442695
    %v1921 = vpow.pop %v1920
    %1923 = vset.pattern.permute.xlu0 1
    %1924 = vperm.xlu0 %1923, %v1907
    %v1925 = vpop.permute.xlu0 %1924
    %1928 = vset.pattern.permute.xlu0 1
    %1929 = vperm.xlu0 %1928, %v1909
    %v1930 = vpop.permute.xlu0 %1929
    %1933 = vset.pattern.permute.xlu0 1
    %1934 = vperm.xlu0 %1933, %v1911
    %v1935 = vpop.permute.xlu0 %1934
    %1938 = vset.pattern.permute.xlu0 1
    %1939 = vperm.xlu0 %1938, %v1913
    %v1940 = vpop.permute.xlu0 %1939
    %1943 = vset.pattern.permute.xlu0 1
    %1944 = vperm.xlu0 %1943, %v1915
    %v1945 = vpop.permute.xlu0 %1944
    %1948 = vset.pattern.permute.xlu0 1
    %1949 = vperm.xlu0 %1948, %v1917
    %v1950 = vpop.permute.xlu0 %1949
    %1953 = vset.pattern.permute.xlu0 1
    %1954 = vperm.xlu0 %1953, %v1919
    %v1955 = vpop.permute.xlu0 %1954
    %1958 = vset.pattern.permute.xlu0 1
    %1959 = vperm.xlu0 %1958, %v1921
    %v1960 = vpop.permute.xlu0 %1959
    %v1962 = vmul.f32 %v45, %v1925
    %v1963 = vmul.f32 %v46, %v1930
    %v1964 = vmul.f32 %v47, %v1935
    %v1965 = vmul.f32 %v48, %v1940
    %v1966 = vmul.f32 %v49, %v1945
    %v1967 = vmul.f32 %v50, %v1950
    %v1968 = vmul.f32 %v51, %v1955
    %v1969 = vmul.f32 %v52, %v1960
    %v1970 = vsel %vm160, %v1962, 0.0
    %v1971 = vsel %vm160, %v1963, 0.0
    %v1972 = vadd.f32 %v1970, %v1971
    %v1973 = vsel %vm160, %v1964, 0.0
    %v1974 = vadd.f32 %v1972, %v1973
    %v1975 = vsel %vm160, %v1965, 0.0
    %v1976 = vadd.f32 %v1974, %v1975
    %v1977 = vsel %vm160, %v1966, 0.0
    %v1978 = vadd.f32 %v1976, %v1977
    %v1979 = vsel %vm160, %v1967, 0.0
    %v1980 = vadd.f32 %v1978, %v1979
    %v1981 = vsel %vm160, %v1968, 0.0
    %v1982 = vadd.f32 %v1980, %v1981
    %v1983 = vsel %vm160, %v1969, 0.0
    %v1984 = vadd.f32 %v1982, %v1983
    %v1985 = vrot.slane %v1984, 4
    %v1986 = vadd.f32 %v1984, %v1985
    %v1987 = vrot.slane %v1986, 2
    %v1988 = vadd.f32 %v1986, %v1987
    %v1989 = vrot.slane %v1988, 1
    %v1990 = vadd.f32 %v1988, %v1989
    %v1991 = vmul.f32 %v45, %v1990
    %v1992 = vmul.f32 %v46, %v1990
    %v1993 = vmul.f32 %v47, %v1990
    %v1994 = vmul.f32 %v48, %v1990
    %v1995 = vmul.f32 %v49, %v1990
    %v1996 = vmul.f32 %v50, %v1990
    %v1997 = vmul.f32 %v51, %v1990
    %v1998 = vmul.f32 %v52, %v1990
    %v1999 = vsel %vm160, %v1991, 0.0
    %2000 = vadd.xlane.f32.xlu0 %v1999
    %v2001 = vpop.xlane.xlu0 %2000
    %v2002 = vsel %vm160, %v1992, 0.0
    %2003 = vadd.xlane.f32.xlu0 %v2002
    %v2004 = vpop.xlane.xlu0 %2003
    %v2005 = vsel %vm160, %v1993, 0.0
    %2006 = vadd.xlane.f32.xlu0 %v2005
    %v2007 = vpop.xlane.xlu0 %2006
    %v2008 = vsel %vm160, %v1994, 0.0
    %2009 = vadd.xlane.f32.xlu0 %v2008
    %v2010 = vpop.xlane.xlu0 %2009
    %v2011 = vsel %vm160, %v1995, 0.0
    %2012 = vadd.xlane.f32.xlu0 %v2011
    %v2013 = vpop.xlane.xlu0 %2012
    %v2014 = vsel %vm160, %v1996, 0.0
    %2015 = vadd.xlane.f32.xlu0 %v2014
    %v2016 = vpop.xlane.xlu0 %2015
    %v2017 = vsel %vm160, %v1997, 0.0
    %2018 = vadd.xlane.f32.xlu0 %v2017
    %v2019 = vpop.xlane.xlu0 %2018
    %v2020 = vsel %vm160, %v1998, 0.0
    %2021 = vadd.xlane.f32.xlu0 %v2020
    %v2022 = vpop.xlane.xlu0 %2021
    %v2023 = vadd.f32 %v2001, 1e-16
    %v2024 = vadd.f32 %v2004, 1e-16
    %v2025 = vadd.f32 %v2007, 1e-16
    %v2026 = vadd.f32 %v2010, 1e-16
    %v2027 = vadd.f32 %v2013, 1e-16
    %v2028 = vadd.f32 %v2016, 1e-16
    %v2029 = vadd.f32 %v2019, 1e-16
    %v2030 = vadd.f32 %v2022, 1e-16
    %v2031 = vrcp.pop %v2023
    %v2032 = vrcp.pop %v2024
    %v2033 = vrcp.pop %v2025
    %v2034 = vrcp.pop %v2026
    %v2035 = vrcp.pop %v2027
    %v2036 = vrcp.pop %v2028
    %v2037 = vrcp.pop %v2029
    %v2038 = vrcp.pop %v2030
    %v2039 = vmul.f32 %v1907, %v2031
    %v2040 = vmul.f32 %v1909, %v2032
    %v2041 = vmul.f32 %v1911, %v2033
    %v2042 = vmul.f32 %v1913, %v2034
    %v2043 = vmul.f32 %v1915, %v2035
    %v2044 = vmul.f32 %v1917, %v2036
    %v2045 = vmul.f32 %v1919, %v2037
    %v2046 = vmul.f32 %v1921, %v2038
    %v2047 = vmul.f32 %v2039, 0.9
    %v2048 = vmul.f32 %v2040, 0.9
    %v2049 = vmul.f32 %v2041, 0.9
    %v2050 = vmul.f32 %v2042, 0.9
    %v2051 = vmul.f32 %v2043, 0.9
    %v2052 = vmul.f32 %v2044, 0.9
    %v2053 = vmul.f32 %v2045, 0.9
    %v2054 = vmul.f32 %v2046, 0.9
    %2056 = vset.pattern.permute.xlu0 1
    %2057 = vperm.xlu0 %2056, %v2047
    %v2058 = vpop.permute.xlu0 %2057
    %2061 = vset.pattern.permute.xlu0 1
    %2062 = vperm.xlu0 %2061, %v2048
    %v2063 = vpop.permute.xlu0 %2062
    %2066 = vset.pattern.permute.xlu0 1
    %2067 = vperm.xlu0 %2066, %v2049
    %v2068 = vpop.permute.xlu0 %2067
    %2071 = vset.pattern.permute.xlu0 1
    %2072 = vperm.xlu0 %2071, %v2050
    %v2073 = vpop.permute.xlu0 %2072
    %2076 = vset.pattern.permute.xlu0 1
    %2077 = vperm.xlu0 %2076, %v2051
    %v2078 = vpop.permute.xlu0 %2077
    %2081 = vset.pattern.permute.xlu0 1
    %2082 = vperm.xlu0 %2081, %v2052
    %v2083 = vpop.permute.xlu0 %2082
    %2086 = vset.pattern.permute.xlu0 1
    %2087 = vperm.xlu0 %2086, %v2053
    %v2088 = vpop.permute.xlu0 %2087
    %2091 = vset.pattern.permute.xlu0 1
    %2092 = vperm.xlu0 %2091, %v2054
    %v2093 = vpop.permute.xlu0 %2092
    %v2095 = vmul.f32 %v2058, %v55
    %v2096 = vmul.f32 %v2063, %v56
    %v2097 = vmul.f32 %v2068, %v57
    %v2098 = vmul.f32 %v2073, %v58
    %v2099 = vmul.f32 %v2078, %v59
    %v2100 = vmul.f32 %v2083, %v60
    %v2101 = vmul.f32 %v2088, %v61
    %v2102 = vmul.f32 %v2093, %v62
    %2103 = vmatprep.subr.mxu0 0.0
    %2104 = vmatpush1.msra.mxu0 0.0
    %2105 = vmatprep.subr.mxu0 0.0
    %2106 = vmatpush1.msra.mxu0 0.0
    %2107 = vmatprep.subr.mxu0 0.0
    %2108 = vmatpush1.msra.mxu0 0.0
    %2109 = vmatprep.subr.mxu0 0.0
    %2110 = vmatpush1.msra.mxu0 0.0
    %2111 = vmatprep.subr.mxu0 0.0
    %2112 = vmatpush1.msra.mxu0 0.0
    %2113 = vmatprep.subr.mxu0 0.0
    %2114 = vmatpush1.msra.mxu0 0.0
    %2115 = vmatprep.subr.mxu0 0.0
    %2116 = vmatpush1.msra.mxu0 0.0
    %2117 = vmatprep.subr.mxu0 0.0
    %2118 = vmatpush1.msra.mxu0 0.0
    %2119 = vmatprep.subr.mxu0 0.0
    %2120 = vmatpush1.msra.mxu0 %v2102
    %2121 = vmatprep.subr.mxu0 0.0
    %2122 = vmatpush1.msra.mxu0 %v2101
    %2123 = vmatprep.subr.mxu0 0.0
    %2124 = vmatpush1.msra.mxu0 %v2100
    %2125 = vmatprep.subr.mxu0 0.0
    %2126 = vmatpush1.msra.mxu0 %v2099
    %2127 = vmatprep.subr.mxu0 0.0
    %2128 = vmatpush1.msra.mxu0 %v2098
    %2129 = vmatprep.subr.mxu0 0.0
    %2130 = vmatpush1.msra.mxu0 %v2097
    %2131 = vmatprep.subr.mxu0 0.0
    %2132 = vmatpush1.msra.mxu0 %v2096
    %2133 = vmatprep.subr.mxu0 0.0
    %2134 = vmatpush1.msra.mxu0 %v2095
    %2135 = vmatprep.subr.mxu0 0.0
    %2136 = vmatpush2.msra.mxu0 0.0
    %2137 = vmatprep.subr.mxu0 0.0
    %2138 = vmatpush2.msra.mxu0 0.0
    %2139 = vmatprep.subr.mxu0 0.0
    %2140 = vmatpush2.msra.mxu0 0.0
    %2141 = vmatprep.subr.mxu0 0.0
    %2142 = vmatpush2.msra.mxu0 0.0
    %2143 = vmatprep.subr.mxu0 0.0
    %2144 = vmatpush2.msra.mxu0 0.0
    %2145 = vmatprep.subr.mxu0 0.0
    %2146 = vmatpush2.msra.mxu0 0.0
    %2147 = vmatprep.subr.mxu0 0.0
    %2148 = vmatpush2.msra.mxu0 0.0
    %2149 = vmatprep.subr.mxu0 0.0
    %2150 = vmatpush2.msra.mxu0 0.0
    %2151 = vmatprep.subr.mxu0 0.0
    %2152 = vmatpush2.msra.mxu0 0.0
    %2153 = vmatprep.subr.mxu0 0.0
    %2154 = vmatpush2.msra.mxu0 0.0
    %2155 = vmatprep.subr.mxu0 0.0
    %2156 = vmatpush2.msra.mxu0 0.0
    %2157 = vmatprep.subr.mxu0 0.0
    %2158 = vmatpush2.msra.mxu0 0.0
    %2159 = vmatprep.subr.mxu0 0.0
    %2160 = vmatpush2.msra.mxu0 0.0
    %2161 = vmatprep.subr.mxu0 0.0
    %2162 = vmatpush2.msra.mxu0 0.0
    %2163 = vmatprep.subr.mxu0 0.0
    %2164 = vmatpush2.msra.mxu0 0.0
    %2165 = vmatprep.subr.mxu0 0.0
    %2166 = vmatpush2.msra.mxu0 0.0
    %2167 = vmatprep.mubr.f32.mxu0 0.0
    %2168 = vmatmul.mubr.f32.gmra.mxu0 %v1488
    %v2169 = vpop.f32.mrf.mxu0
    %v2170 = vadd.f32 0.0, %v2169
    %v2171 = vpop.f32.mrf.mxu0
    %2172 = vmatprep.mubr.f32.mxu0 0.0
    %2173 = vmatmul.mubr.f32.gmra.mxu0 %v1491
    %v2174 = vpop.f32.mrf.mxu0
    %v2175 = vadd.f32 0.0, %v2174
    %v2176 = vpop.f32.mrf.mxu0
    %2177 = vdwg.mxu0
    %v2179 = vsel %vm160, %v2170, 0
    %v2182 = vsel %vm160, %v2175, 0
    %2184 = vmatprep.subr.mxu0 0.0
    %2185 = vmatpush1.msra.mxu0 0.0
    %2186 = vmatprep.subr.mxu0 0.0
    %2187 = vmatpush1.msra.mxu0 0.0
    %2188 = vmatprep.subr.mxu0 0.0
    %2189 = vmatpush1.msra.mxu0 0.0
    %2190 = vmatprep.subr.mxu0 0.0
    %2191 = vmatpush1.msra.mxu0 0.0
    %2192 = vmatprep.subr.mxu0 0.0
    %2193 = vmatpush1.msra.mxu0 0.0
    %2194 = vmatprep.subr.mxu0 0.0
    %2195 = vmatpush1.msra.mxu0 0.0
    %2196 = vmatprep.subr.mxu0 0.0
    %2197 = vmatpush1.msra.mxu0 0.0
    %2198 = vmatprep.subr.mxu0 0.0
    %2199 = vmatpush1.msra.mxu0 0.0
    %2200 = vmatprep.subr.mxu0 0.0
    %2201 = vmatpush1.msra.mxu0 0.0
    %2202 = vmatprep.subr.mxu0 0.0
    %2203 = vmatpush1.msra.mxu0 0.0
    %2204 = vmatprep.subr.mxu0 0.0
    %2205 = vmatpush1.msra.mxu0 0.0
    %2206 = vmatprep.subr.mxu0 0.0
    %2207 = vmatpush1.msra.mxu0 0.0
    %2208 = vmatprep.subr.mxu0 0.0
    %2209 = vmatpush1.msra.mxu0 0.0
    %2210 = vmatprep.subr.mxu0 0.0
    %2211 = vmatpush1.msra.mxu0 0.0
    %2212 = vmatprep.subr.mxu0 0.0
    %2213 = vmatpush1.msra.mxu0 %v72
    %2214 = vmatprep.subr.mxu0 0.0
    %2215 = vmatpush1.msra.mxu0 %v71
    %2216 = vmatprep.subr.mxu0 0.0
    %2217 = vmatpush2.msra.mxu0 0.0
    %2218 = vmatprep.subr.mxu0 0.0
    %2219 = vmatpush2.msra.mxu0 0.0
    %2220 = vmatprep.subr.mxu0 0.0
    %2221 = vmatpush2.msra.mxu0 0.0
    %2222 = vmatprep.subr.mxu0 0.0
    %2223 = vmatpush2.msra.mxu0 0.0
    %2224 = vmatprep.subr.mxu0 0.0
    %2225 = vmatpush2.msra.mxu0 0.0
    %2226 = vmatprep.subr.mxu0 0.0
    %2227 = vmatpush2.msra.mxu0 0.0
    %2228 = vmatprep.subr.mxu0 0.0
    %2229 = vmatpush2.msra.mxu0 0.0
    %2230 = vmatprep.subr.mxu0 0.0
    %2231 = vmatpush2.msra.mxu0 0.0
    %2232 = vmatprep.subr.mxu0 0.0
    %2233 = vmatpush2.msra.mxu0 0.0
    %2234 = vmatprep.subr.mxu0 0.0
    %2235 = vmatpush2.msra.mxu0 0.0
    %2236 = vmatprep.subr.mxu0 0.0
    %2237 = vmatpush2.msra.mxu0 0.0
    %2238 = vmatprep.subr.mxu0 0.0
    %2239 = vmatpush2.msra.mxu0 0.0
    %2240 = vmatprep.subr.mxu0 0.0
    %2241 = vmatpush2.msra.mxu0 0.0
    %2242 = vmatprep.subr.mxu0 0.0
    %2243 = vmatpush2.msra.mxu0 0.0
    %2244 = vmatprep.subr.mxu0 0.0
    %2245 = vmatpush2.msra.mxu0 0.0
    %2246 = vmatprep.subr.mxu0 0.0
    %2247 = vmatpush2.msra.mxu0 0.0
    %2248 = vmatprep.mubr.f32.mxu0 0.0
    %2249 = vmatmul.mubr.f32.gmra.mxu0 %v2179
    %v2250 = vpop.f32.mrf.mxu0
    %v2251 = vadd.f32 %v1568, %v2250
    %v2252 = vpop.f32.mrf.mxu0
    %2253 = vmatprep.mubr.f32.mxu0 0.0
    %2254 = vmatmul.mubr.f32.gmra.mxu0 %v2182
    %v2255 = vpop.f32.mrf.mxu0
    %v2256 = vadd.f32 %v1569, %v2255
    %v2257 = vpop.f32.mrf.mxu0
    %2258 = vdwg.mxu0
    %2259 = vmatprep.subr.mxu0 0.0
    %2260 = vmatpush1.msra.mxu0 0.0
    %2261 = vmatprep.subr.mxu0 0.0
    %2262 = vmatpush1.msra.mxu0 0.0
    %2263 = vmatprep.subr.mxu0 0.0
    %2264 = vmatpush1.msra.mxu0 0.0
    %2265 = vmatprep.subr.mxu0 0.0
    %2266 = vmatpush1.msra.mxu0 0.0
    %2267 = vmatprep.subr.mxu0 0.0
    %2268 = vmatpush1.msra.mxu0 0.0
    %2269 = vmatprep.subr.mxu0 0.0
    %2270 = vmatpush1.msra.mxu0 0.0
    %2271 = vmatprep.subr.mxu0 0.0
    %2272 = vmatpush1.msra.mxu0 0.0
    %2273 = vmatprep.subr.mxu0 0.0
    %2274 = vmatpush1.msra.mxu0 0.0
    %2275 = vmatprep.subr.mxu0 0.0
    %2276 = vmatpush1.msra.mxu0 0.0
    %2277 = vmatprep.subr.mxu0 0.0
    %2278 = vmatpush1.msra.mxu0 0.0
    %2279 = vmatprep.subr.mxu0 0.0
    %2280 = vmatpush1.msra.mxu0 0.0
    %2281 = vmatprep.subr.mxu0 0.0
    %2282 = vmatpush1.msra.mxu0 0.0
    %2283 = vmatprep.subr.mxu0 0.0
    %2284 = vmatpush1.msra.mxu0 0.0
    %2285 = vmatprep.subr.mxu0 0.0
    %2286 = vmatpush1.msra.mxu0 0.0
    %2287 = vmatprep.subr.mxu0 0.0
    %2288 = vmatpush1.msra.mxu0 %v2256
    %2289 = vmatprep.subr.mxu0 0.0
    %2290 = vmatpush1.msra.mxu0 %v2251
    %2291 = vmatprep.subr.mxu0 0.0
    %2292 = vmatpush2.msra.mxu0 0.0
    %2293 = vmatprep.subr.mxu0 0.0
    %2294 = vmatpush2.msra.mxu0 0.0
    %2295 = vmatprep.subr.mxu0 0.0
    %2296 = vmatpush2.msra.mxu0 0.0
    %2297 = vmatprep.subr.mxu0 0.0
    %2298 = vmatpush2.msra.mxu0 0.0
    %2299 = vmatprep.subr.mxu0 0.0
    %2300 = vmatpush2.msra.mxu0 0.0
    %2301 = vmatprep.subr.mxu0 0.0
    %2302 = vmatpush2.msra.mxu0 0.0
    %2303 = vmatprep.subr.mxu0 0.0
    %2304 = vmatpush2.msra.mxu0 0.0
    %2305 = vmatprep.subr.mxu0 0.0
    %2306 = vmatpush2.msra.mxu0 0.0
    %2307 = vmatprep.subr.mxu0 0.0
    %2308 = vmatpush2.msra.mxu0 0.0
    %2309 = vmatprep.subr.mxu0 0.0
    %2310 = vmatpush2.msra.mxu0 0.0
    %2311 = vmatprep.subr.mxu0 0.0
    %2312 = vmatpush2.msra.mxu0 0.0
    %2313 = vmatprep.subr.mxu0 0.0
    %2314 = vmatpush2.msra.mxu0 0.0
    %2315 = vmatprep.subr.mxu0 0.0
    %2316 = vmatpush2.msra.mxu0 0.0
    %2317 = vmatprep.subr.mxu0 0.0
    %2318 = vmatpush2.msra.mxu0 0.0
    %2319 = vmatprep.subr.mxu0 0.0
    %2320 = vmatpush2.msra.mxu0 0.0
    %2321 = vmatprep.subr.mxu0 0.0
    %2322 = vmatpush2.msra.mxu0 0.0
    %2323 = vmatprep.mubr.f32.mxu0 0.0
    %2324 = vmatmul.mubr.f32.gmra.mxu0 %v2179
    %v2325 = vpop.f32.mrf.mxu0
    %v2326 = vadd.f32 %v1568, %v2325
    %v2327 = vpop.f32.mrf.mxu0
    %2328 = vmatprep.mubr.f32.mxu0 0.0
    %2329 = vmatmul.mubr.f32.gmra.mxu0 %v2182
    %v2330 = vpop.f32.mrf.mxu0
    %v2331 = vadd.f32 %v1569, %v2330
    %v2332 = vpop.f32.mrf.mxu0
    %2333 = vdwg.mxu0
    %2334 = vmatprep.subr.mxu0 0.0
    %2335 = vmatpush1.msra.mxu0 0.0
    %2336 = vmatprep.subr.mxu0 0.0
    %2337 = vmatpush1.msra.mxu0 0.0
    %2338 = vmatprep.subr.mxu0 0.0
    %2339 = vmatpush1.msra.mxu0 0.0
    %2340 = vmatprep.subr.mxu0 0.0
    %2341 = vmatpush1.msra.mxu0 0.0
    %2342 = vmatprep.subr.mxu0 0.0
    %2343 = vmatpush1.msra.mxu0 0.0
    %2344 = vmatprep.subr.mxu0 0.0
    %2345 = vmatpush1.msra.mxu0 0.0
    %2346 = vmatprep.subr.mxu0 0.0
    %2347 = vmatpush1.msra.mxu0 0.0
    %2348 = vmatprep.subr.mxu0 0.0
    %2349 = vmatpush1.msra.mxu0 0.0
    %2350 = vmatprep.subr.mxu0 0.0
    %2351 = vmatpush1.msra.mxu0 0.0
    %2352 = vmatprep.subr.mxu0 0.0
    %2353 = vmatpush1.msra.mxu0 0.0
    %2354 = vmatprep.subr.mxu0 0.0
    %2355 = vmatpush1.msra.mxu0 0.0
    %2356 = vmatprep.subr.mxu0 0.0
    %2357 = vmatpush1.msra.mxu0 0.0
    %2358 = vmatprep.subr.mxu0 0.0
    %2359 = vmatpush1.msra.mxu0 0.0
    %2360 = vmatprep.subr.mxu0 0.0
    %2361 = vmatpush1.msra.mxu0 0.0
    %2362 = vmatprep.subr.mxu0 0.0
    %2363 = vmatpush1.msra.mxu0 %v2331
    %2364 = vmatprep.subr.mxu0 0.0
    %2365 = vmatpush1.msra.mxu0 %v2326
    %2366 = vmatprep.subr.mxu0 0.0
    %2367 = vmatpush2.msra.mxu0 0.0
    %2368 = vmatprep.subr.mxu0 0.0
    %2369 = vmatpush2.msra.mxu0 0.0
    %2370 = vmatprep.subr.mxu0 0.0
    %2371 = vmatpush2.msra.mxu0 0.0
    %2372 = vmatprep.subr.mxu0 0.0
    %2373 = vmatpush2.msra.mxu0 0.0
    %2374 = vmatprep.subr.mxu0 0.0
    %2375 = vmatpush2.msra.mxu0 0.0
    %2376 = vmatprep.subr.mxu0 0.0
    %2377 = vmatpush2.msra.mxu0 0.0
    %2378 = vmatprep.subr.mxu0 0.0
    %2379 = vmatpush2.msra.mxu0 0.0
    %2380 = vmatprep.subr.mxu0 0.0
    %2381 = vmatpush2.msra.mxu0 0.0
    %2382 = vmatprep.subr.mxu0 0.0
    %2383 = vmatpush2.msra.mxu0 0.0
    %2384 = vmatprep.subr.mxu0 0.0
    %2385 = vmatpush2.msra.mxu0 0.0
    %2386 = vmatprep.subr.mxu0 0.0
    %2387 = vmatpush2.msra.mxu0 0.0
    %2388 = vmatprep.subr.mxu0 0.0
    %2389 = vmatpush2.msra.mxu0 0.0
    %2390 = vmatprep.subr.mxu0 0.0
    %2391 = vmatpush2.msra.mxu0 0.0
    %2392 = vmatprep.subr.mxu0 0.0
    %2393 = vmatpush2.msra.mxu0 0.0
    %2394 = vmatprep.subr.mxu0 0.0
    %2395 = vmatpush2.msra.mxu0 0.0
    %2396 = vmatprep.subr.mxu0 0.0
    %2397 = vmatpush2.msra.mxu0 0.0
    %2398 = vmatprep.mubr.f32.mxu0 0.0
    %2399 = vmatmul.mubr.f32.gmra.mxu0 %v2179
    %v2400 = vpop.f32.mrf.mxu0
    %v2401 = vadd.f32 %v1568, %v2400
    %v2402 = vpop.f32.mrf.mxu0
    %2403 = vmatprep.mubr.f32.mxu0 0.0
    %2404 = vmatmul.mubr.f32.gmra.mxu0 %v2182
    %v2405 = vpop.f32.mrf.mxu0
    %v2406 = vadd.f32 %v1569, %v2405
    %v2407 = vpop.f32.mrf.mxu0
    %2408 = vdwg.mxu0
    %v2409 = vld [vmem:[%s12 + $0x20] sm:$0xff]
    %v2410 = vld [vmem:[%s12 + $0x28] sm:$0xff]
    %v2411 = vld [vmem:[%s12 + $0x30] sm:$0xff]
    %v2412 = vld [vmem:[%s12 + $0x38] sm:$0xff]
    %v2414 = vsel %vm78, %v2401, 0
    %v2417 = vsel %vm78, %v2406, 0
    %2419 = vmatprep.subr.mxu0 0.0
    %2420 = vmatpush1.msra.mxu0 0.0
    %2421 = vmatprep.subr.mxu0 0.0
    %2422 = vmatpush1.msra.mxu0 0.0
    %2423 = vmatprep.subr.mxu0 0.0
    %2424 = vmatpush1.msra.mxu0 0.0
    %2425 = vmatprep.subr.mxu0 0.0
    %2426 = vmatpush1.msra.mxu0 0.0
    %2427 = vmatprep.subr.mxu0 0.0
    %2428 = vmatpush1.msra.mxu0 0.0
    %2429 = vmatprep.subr.mxu0 0.0
    %2430 = vmatpush1.msra.mxu0 0.0
    %2431 = vmatprep.subr.mxu0 0.0
    %2432 = vmatpush1.msra.mxu0 0.0
    %2433 = vmatprep.subr.mxu0 0.0
    %2434 = vmatpush1.msra.mxu0 0.0
    %2435 = vmatprep.subr.mxu0 0.0
    %2436 = vmatpush1.msra.mxu0 0.0
    %2437 = vmatprep.subr.mxu0 0.0
    %2438 = vmatpush1.msra.mxu0 0.0
    %2439 = vmatprep.subr.mxu0 0.0
    %2440 = vmatpush1.msra.mxu0 0.0
    %2441 = vmatprep.subr.mxu0 0.0
    %2442 = vmatpush1.msra.mxu0 0.0
    %2443 = vmatprep.subr.mxu0 0.0
    %2444 = vmatpush1.msra.mxu0 %v2412
    %2445 = vmatprep.subr.mxu0 0.0
    %2446 = vmatpush1.msra.mxu0 %v2411
    %2447 = vmatprep.subr.mxu0 0.0
    %2448 = vmatpush1.msra.mxu0 %v2410
    %2449 = vmatprep.subr.mxu0 0.0
    %2450 = vmatpush1.msra.mxu0 %v2409
    %2451 = vmatprep.subr.mxu0 0.0
    %2452 = vmatpush2.msra.mxu0 0.0
    %2453 = vmatprep.subr.mxu0 0.0
    %2454 = vmatpush2.msra.mxu0 0.0
    %2455 = vmatprep.subr.mxu0 0.0
    %2456 = vmatpush2.msra.mxu0 0.0
    %2457 = vmatprep.subr.mxu0 0.0
    %2458 = vmatpush2.msra.mxu0 0.0
    %2459 = vmatprep.subr.mxu0 0.0
    %2460 = vmatpush2.msra.mxu0 0.0
    %2461 = vmatprep.subr.mxu0 0.0
    %2462 = vmatpush2.msra.mxu0 0.0
    %2463 = vmatprep.subr.mxu0 0.0
    %2464 = vmatpush2.msra.mxu0 0.0
    %2465 = vmatprep.subr.mxu0 0.0
    %2466 = vmatpush2.msra.mxu0 0.0
    %2467 = vmatprep.subr.mxu0 0.0
    %2468 = vmatpush2.msra.mxu0 0.0
    %2469 = vmatprep.subr.mxu0 0.0
    %2470 = vmatpush2.msra.mxu0 0.0
    %2471 = vmatprep.subr.mxu0 0.0
    %2472 = vmatpush2.msra.mxu0 0.0
    %2473 = vmatprep.subr.mxu0 0.0
    %2474 = vmatpush2.msra.mxu0 0.0
    %2475 = vmatprep.subr.mxu0 0.0
    %2476 = vmatpush2.msra.mxu0 0.0
    %2477 = vmatprep.subr.mxu0 0.0
    %2478 = vmatpush2.msra.mxu0 0.0
    %2479 = vmatprep.subr.mxu0 0.0
    %2480 = vmatpush2.msra.mxu0 0.0
    %2481 = vmatprep.subr.mxu0 0.0
    %2482 = vmatpush2.msra.mxu0 0.0
    %2483 = vmatprep.mubr.f32.mxu0 0.0
    %2484 = vmatmul.mubr.f32.gmra.mxu0 %v2414
    %v2485 = vpop.f32.mrf.mxu0
    %v2486 = vadd.f32 0.0, %v2485
    %v2487 = vpop.f32.mrf.mxu0
    %2488 = vmatprep.mubr.f32.mxu0 0.0
    %2489 = vmatmul.mubr.f32.gmra.mxu0 %v2417
    %v2490 = vpop.f32.mrf.mxu0
    %v2491 = vadd.f32 0.0, %v2490
    %v2492 = vpop.f32.mrf.mxu0
    %2493 = vdwg.mxu0
    %v2495 = vsel %vm78, %v1793, 0
    %v2498 = vsel %vm78, %v1798, 0
    %2500 = vmatprep.subr.mxu0 0.0
    %2501 = vmatpush1.msra.mxu0 0.0
    %2502 = vmatprep.subr.mxu0 0.0
    %2503 = vmatpush1.msra.mxu0 0.0
    %2504 = vmatprep.subr.mxu0 0.0
    %2505 = vmatpush1.msra.mxu0 0.0
    %2506 = vmatprep.subr.mxu0 0.0
    %2507 = vmatpush1.msra.mxu0 0.0
    %2508 = vmatprep.subr.mxu0 0.0
    %2509 = vmatpush1.msra.mxu0 0.0
    %2510 = vmatprep.subr.mxu0 0.0
    %2511 = vmatpush1.msra.mxu0 0.0
    %2512 = vmatprep.subr.mxu0 0.0
    %2513 = vmatpush1.msra.mxu0 0.0
    %2514 = vmatprep.subr.mxu0 0.0
    %2515 = vmatpush1.msra.mxu0 0.0
    %2516 = vmatprep.subr.mxu0 0.0
    %2517 = vmatpush1.msra.mxu0 0.0
    %2518 = vmatprep.subr.mxu0 0.0
    %2519 = vmatpush1.msra.mxu0 0.0
    %2520 = vmatprep.subr.mxu0 0.0
    %2521 = vmatpush1.msra.mxu0 0.0
    %2522 = vmatprep.subr.mxu0 0.0
    %2523 = vmatpush1.msra.mxu0 0.0
    %2524 = vmatprep.subr.mxu0 0.0
    %2525 = vmatpush1.msra.mxu0 %v1804
    %2526 = vmatprep.subr.mxu0 0.0
    %2527 = vmatpush1.msra.mxu0 %v1803
    %2528 = vmatprep.subr.mxu0 0.0
    %2529 = vmatpush1.msra.mxu0 %v1802
    %2530 = vmatprep.subr.mxu0 0.0
    %2531 = vmatpush1.msra.mxu0 %v1801
    %2532 = vmatprep.subr.mxu0 0.0
    %2533 = vmatpush2.msra.mxu0 0.0
    %2534 = vmatprep.subr.mxu0 0.0
    %2535 = vmatpush2.msra.mxu0 0.0
    %2536 = vmatprep.subr.mxu0 0.0
    %2537 = vmatpush2.msra.mxu0 0.0
    %2538 = vmatprep.subr.mxu0 0.0
    %2539 = vmatpush2.msra.mxu0 0.0
    %2540 = vmatprep.subr.mxu0 0.0
    %2541 = vmatpush2.msra.mxu0 0.0
    %2542 = vmatprep.subr.mxu0 0.0
    %2543 = vmatpush2.msra.mxu0 0.0
    %2544 = vmatprep.subr.mxu0 0.0
    %2545 = vmatpush2.msra.mxu0 0.0
    %2546 = vmatprep.subr.mxu0 0.0
    %2547 = vmatpush2.msra.mxu0 0.0
    %2548 = vmatprep.subr.mxu0 0.0
    %2549 = vmatpush2.msra.mxu0 0.0
    %2550 = vmatprep.subr.mxu0 0.0
    %2551 = vmatpush2.msra.mxu0 0.0
    %2552 = vmatprep.subr.mxu0 0.0
    %2553 = vmatpush2.msra.mxu0 0.0
    %2554 = vmatprep.subr.mxu0 0.0
    %2555 = vmatpush2.msra.mxu0 0.0
    %2556 = vmatprep.subr.mxu0 0.0
    %2557 = vmatpush2.msra.mxu0 0.0
    %2558 = vmatprep.subr.mxu0 0.0
    %2559 = vmatpush2.msra.mxu0 0.0
    %2560 = vmatprep.subr.mxu0 0.0
    %2561 = vmatpush2.msra.mxu0 0.0
    %2562 = vmatprep.subr.mxu0 0.0
    %2563 = vmatpush2.msra.mxu0 0.0
    %2564 = vmatprep.mubr.f32.mxu0 0.0
    %2565 = vmatmul.mubr.f32.gmra.mxu0 %v2495
    %v2566 = vpop.f32.mrf.mxu0
    %v2567 = vadd.f32 %v2486, %v2566
    %v2568 = vpop.f32.mrf.mxu0
    %2569 = vmatprep.mubr.f32.mxu0 0.0
    %2570 = vmatmul.mubr.f32.gmra.mxu0 %v2498
    %v2571 = vpop.f32.mrf.mxu0
    %v2572 = vadd.f32 %v2491, %v2571
    %v2573 = vpop.f32.mrf.mxu0
    %2574 = vdwg.mxu0
    %2575 = vst.msk [vmem:[#allocation2] sm:$0xff] %vm78, %v2567
    %2576 = vst.msk [vmem:[#allocation2 + $0x8] sm:$0xff] %vm78, %v2572
    // Predicated region
    $region54: #{dagn_conv_forward.1} parent=1 // pred_check
      _
    $region55: #{dagn_conv_forward.1} parent=1 // pred_check_branch
      %2578 = sbr.rel (0) target = $region57
    $region56: #{dagn_conv_forward.1} parent=1 // pred_region
      %s2580 = ssub.s32 256, 256
      %2581 = vsyncadd [#allocation3], %s2580
      %s2582 = sshll.u32 [#allocation2], 4
      %s2583 = int_to_ptr.vmem [resolvable:$true] %s2582
      %2588 = dma.vmem_to_hbm [thread:$0]  %s2583, 256, %s13, [#allocation3], 128, 128, 8
    $region57: #{dagn_conv_forward.1} parent=1 // pred_fallthru
      _
    // Predicated region
    $region58: #{dagn_conv_forward.1} parent=1 // pred_check
      _
    $region59: #{dagn_conv_forward.1} parent=1 // pred_check_branch
      %2590 = sbr.rel (0) target = $region61
    $region60: #{dagn_conv_forward.1} parent=1 // pred_region
      %2591 = dma.done [#allocation3], 256
    $region61: #{dagn_conv_forward.1} parent=1 // pred_fallthru
      _
    %2592 = vsyncpa [#allocation3], 1

</llo_original>
